<compile_context>
chip_gen: v7x
topology: tpu7x:2x2x1
jax: 0.10.0
libtpu: 0.0.40
codegen_flags: <defaults>
</compile_context>

<pallas_src>
import functools

import jax
import jax.numpy as jnp
from jax import lax
from jax.experimental import pallas as pl
from jax.experimental.pallas import tpu as pltpu

# ----- hyper-parameters (consistent with the PyTorch module) -----
RES_CH = 8             # res_channels (== BatchNorm1d(8), LSTM input_size=8)
SKIP_CH = 8            # skip_channels
KERNEL_SIZE = 3        # wavenet block kernel size
DILATION_DEPTH = 3
N_REPEAT = 1
DILATIONS = [2 ** i for i in range(DILATION_DEPTH)] * N_REPEAT
NB = len(DILATIONS)
DMAX = max(DILATIONS)
PRE_K = 31             # pre_conv kernel size
PRE_PAD = 1            # pre_conv padding
HIDDEN = 20            # LSTM hidden size
GATES = 4 * HIDDEN
BN_EPS = 1e-5

B = 2
L_IN = 64
L_OUT = L_IN + 2 * PRE_PAD - PRE_K + 1      # 36


# ------------------------------------------------------------------
# Single fused kernel: pre_conv -> BN -> 3 dilated blocks -> head, and
# the LSTM(8->20) + lstmfc(20->1) path, combined at the end.
# ------------------------------------------------------------------
def seriesnet_kernel(x_ref, w_pre_ref, gamma_ref, beta_ref, w_dil_ref, b_dil_ref,
                     w_skip_ref, w_conv_ref, b_conv_ref,
                     w_ih_ref, w_hh_ref, b_lstm_ref, w_fc_ref, b_fc_ref,
                     out_ref, xp_ref, hs_ref, *, batch, l_out):
    f32 = jnp.float32
    width = batch * l_out                                     # batch folded into lanes

    # ---- pre_conv: Conv1d(8->8, k=31, pad=1, no bias) via per-batch im2col ----
    zpad = jnp.zeros((RES_CH, PRE_PAD), f32)
    conv_cols = []
    for b in range(batch):
        xb = jnp.concatenate([zpad, x_ref[b], zpad], axis=1)            # (C, L_in+2)
        col = jnp.concatenate([xb[:, t:t + l_out] for t in range(PRE_K)], axis=0)  # (C*K, L)
        conv_cols.append(jnp.dot(w_pre_ref[...], col, preferred_element_type=f32))  # (C, L)
    conv = jnp.concatenate(conv_cols, axis=1)                            # (C, B*L), lane = b*L + j

    # ---- BatchNorm1d statistics (training mode), shared by all blocks ----
    cnt = float(width)
    mean = jnp.sum(conv, axis=1, keepdims=True) / cnt                    # (C, 1)
    var = jnp.sum(conv * conv, axis=1, keepdims=True) / cnt - mean * mean
    norm = (conv - mean) * lax.rsqrt(var + BN_EPS)                       # (C, B*L)

    zmax = jnp.zeros((RES_CH, DMAX), f32)
    norm_pad = jnp.concatenate([zmax, norm, zmax], axis=1)               # (C, B*L + 2*DMAX)
    pos1 = lax.broadcasted_iota(jnp.int32, (1, l_out), 1)
    pos = jnp.concatenate([pos1] * batch, axis=1)                        # within-batch position

    # ---- wavenet blocks: BN affine + dilated conv (k=3, "same") + 1x1 skip ----
    skip_sum = jnp.zeros((SKIP_CH, width), f32)
    for i, d in enumerate(DILATIONS):
        bn_pad = gamma_ref[i] * norm_pad + beta_ref[i]                   # (C, B*L + 2*DMAX)
        segs = []
        for t in range(KERNEL_SIZE):
            off = (t - (KERNEL_SIZE - 1) // 2) * d                       # -d, 0, +d
            seg = bn_pad[:, DMAX + off: DMAX + off + width]              # (C, B*L)
            if off != 0:
                # conv zero-padding AND "don't cross the batch boundary" mask
                valid = (pos + off >= 0) & (pos + off < l_out)
                seg = jnp.where(valid, seg, 0.0)
            segs.append(seg)
        seg_cat = jnp.concatenate(segs, axis=0)                          # (K*C, B*L)
        dil = jnp.dot(w_dil_ref[i], seg_cat, preferred_element_type=f32) + b_dil_ref[i]
        skip_sum = skip_sum + jnp.dot(w_skip_ref[i], dil, preferred_element_type=f32)
        # NOTE: the torch residual path (residual_conv + add) is never consumed
        # downstream in SeriesnetNet.forward, so it is intentionally dropped.

    # ---- head: sum(skips) -> ReLU -> 1x1 conv (8->1), produced in (B, L) layout ----
    relu = jnp.maximum(skip_sum, 0.0)
    head_rows = [jnp.dot(w_conv_ref[...], relu[:, b * l_out:(b + 1) * l_out],
                         preferred_element_type=f32) for b in range(batch)]
    head_bl = jnp.concatenate(head_rows, axis=0) + b_conv_ref[...]       # (B, L)

    # ---- LSTM: fused-gate input projection for ALL timesteps in one matmul ----
    xp_ref[...] = (jnp.dot(jnp.transpose(conv), w_ih_ref[...],
                           preferred_element_type=f32) + b_lstm_ref[...])  # (B*L, 4H), row = b*L + t

    def step(t, carry):
        h, c = carry                                                      # (B, H) each
        xg = jnp.concatenate(
            [xp_ref[pl.ds(b * l_out + t, 1), :] for b in range(batch)], axis=0)   # (B, 4H)
        gates = xg + jnp.dot(h, w_hh_ref[...], preferred_element_type=f32)         # (B, 4H)
        i_g = jax.nn.sigmoid(gates[:, 0 * HIDDEN:1 * HIDDEN])
        f_g = jax.nn.sigmoid(gates[:, 1 * HIDDEN:2 * HIDDEN])
        g_g = jnp.tanh(gates[:, 2 * HIDDEN:3 * HIDDEN])
        o_g = jax.nn.sigmoid(gates[:, 3 * HIDDEN:4 * HIDDEN])
        c_new = f_g * c + i_g * g_g
        h_new = o_g * jnp.tanh(c_new)
        hs_ref[t] = h_new                                                 # stash h, no per-step fc
        return (h_new, c_new)

    h0 = jnp.zeros((batch, HIDDEN), f32)
    c0 = jnp.zeros((batch, HIDDEN), f32)
    lax.fori_loop(0, l_out, step, (h0, c0))

    # ---- lstmfc (20->1) applied to all hidden states at once + final product ----
    hs_all = hs_ref[...]                                                  # (L, B, H)
    y_lb = jnp.sum(hs_all * w_fc_ref[...].reshape(1, 1, HIDDEN), axis=-1) + b_fc_ref[...]  # (L, B)
    y_bl = jnp.transpose(y_lb)                                            # (B, L)
    out_ref[...] = head_bl * y_bl                                         # (B, L)


# ------------------------------------------------------------------
# Wrapper: single pallas_call under jit, only a trivial trailing reshape outside
# ------------------------------------------------------------------
@jax.jit
def seriesnet_forward(x, params):
    batch, _, l_in = x.shape
    l_out = l_in + 2 * PRE_PAD - PRE_K + 1
    kernel = functools.partial(seriesnet_kernel, batch=batch, l_out=l_out)
    out_bl = pl.pallas_call(
        kernel,
        out_shape=jax.ShapeDtypeStruct((batch, l_out), jnp.float32),
        scratch_shapes=[pltpu.VMEM((batch * l_out, GATES), jnp.float32),   # LSTM input proj
                        pltpu.VMEM((l_out, batch, HIDDEN), jnp.float32)],  # LSTM hidden states
    )(x, params['w_pre'], params['gamma'], params['beta'], params['w_dil'],
      params['b_dil'], params['w_skip'], params['w_conv'], params['b_conv'],
      params['w_ih'], params['w_hh'], params['b_lstm'], params['w_fc'], params['b_fc'])
    return out_bl[..., None]            # (B, L, 1) == output.permute(0, 2, 1)


# ------------------------------------------------------------------
# Deterministic synthetic parameters (kernel-ready layouts; shapes follow torch)
# ------------------------------------------------------------------
def init_params(key):
    keys = iter(jax.random.split(key, 32))

    def nrm(shape, std):
        return std * jax.random.normal(next(keys), shape, dtype=jnp.float32)

    p = {}
    # pre_conv: torch weight (O=8, I=8, K=31), no bias -> flat (O, K*I), col = t*I + i
    w_pre = nrm((SKIP_CH, RES_CH, PRE_K), 0.01)
    p['w_pre'] = jnp.transpose(w_pre, (0, 2, 1)).reshape(SKIP_CH, PRE_K * RES_CH)

    gam, bet, wd, bd, ws = [], [], [], [], []
    for _ in DILATIONS:
        gam.append(jnp.ones((RES_CH, 1), jnp.float32))        # BatchNorm defaults
        bet.append(jnp.zeros((RES_CH, 1), jnp.float32))
        w = nrm((RES_CH, RES_CH, KERNEL_SIZE), 0.1)           # torch (O, I, K)
        wd.append(jnp.transpose(w, (0, 2, 1)).reshape(RES_CH, KERNEL_SIZE * RES_CH))
        bd.append(nrm((RES_CH, 1), 0.1))
        ws.append(nrm((SKIP_CH, RES_CH), 0.1))                # 1x1 skip conv, bias=False
    p['gamma'] = jnp.stack(gam)
    p['beta'] = jnp.stack(bet)
    p['w_dil'] = jnp.stack(wd)
    p['b_dil'] = jnp.stack(bd)
    p['w_skip'] = jnp.stack(ws)

    # final 1x1 conv: Conv1d(8 -> 1) with bias
    p['w_conv'] = nrm((1, SKIP_CH), 0.1)
    p['b_conv'] = nrm((1, 1), 0.1)

    # LSTM torch layout: W_ih (4H, in), W_hh (4H, H), biases (4H,); gate order i,f,g,o
    w_ih = nrm((GATES, RES_CH), 0.1)
    w_hh = nrm((GATES, HIDDEN), 0.1)
    b_ih = nrm((GATES,), 0.1)
    b_hh = nrm((GATES,), 0.1)
    p['w_ih'] = jnp.transpose(w_ih)          # (in, 4H), fused gates
    p['w_hh'] = jnp.transpose(w_hh)          # (H, 4H)
    p['b_lstm'] = (b_ih + b_hh)[None, :]     # (1, 4H)

    # lstmfc: Linear(20 -> 1)
    p['w_fc'] = nrm((1, HIDDEN), 0.1)
    p['b_fc'] = nrm((1, 1), 0.1)
    return p


# ------------------------------------------------------------------
# Pure-JAX reference (correctness sanity check)
# ------------------------------------------------------------------
def reference_forward(x, params):
    dn = ('NCH', 'OIH', 'NCH')
    w_pre = params['w_pre'].reshape(SKIP_CH, PRE_K, RES_CH).transpose(0, 2, 1)   # (O, I, K)
    conv = lax.conv_general_dilated(x, w_pre, (1,), [(PRE_PAD, PRE_PAD)],
                                    dimension_numbers=dn)
    mean = jnp.mean(conv, axis=(0, 2), keepdims=True)
    var = jnp.mean((conv - mean) ** 2, axis=(0, 2), keepdims=True)

    skips = []
    for i, d in enumerate(DILATIONS):
        bn = ((conv - mean) * lax.rsqrt(var + BN_EPS)
              * params['gamma'][i].reshape(1, RES_CH, 1)
              + params['beta'][i].reshape(1, RES_CH, 1))
        w_dil = params['w_dil'][i].reshape(RES_CH, KERNEL_SIZE, RES_CH).transpose(0, 2, 1)
        dil = lax.conv_general_dilated(bn, w_dil, (1,), [(d, d)], rhs_dilation=(d,),
                                       dimension_numbers=dn)
        dil = dil + params['b_dil'][i].reshape(1, RES_CH, 1)
        skips.append(jnp.einsum('oc,bcl->bol', params['w_skip'][i], dil))
    s = sum(skips)
    r = jnp.maximum(s, 0.0)
    outputs = jnp.einsum('oc,bcl->bol', params['w_conv'], r) + params['b_conv'].reshape(1, 1, 1)

    xseq = jnp.transpose(conv, (2, 0, 1))                      # (L, B, C)
    wih, whh, bias = params['w_ih'], params['w_hh'], params['b_lstm']

    def step(carry, x_t):
        h, c = carry
        g = x_t @ wih + h @ whh + bias
        i_g = jax.nn.sigmoid(g[:, 0 * HIDDEN:1 * HIDDEN])
        f_g = jax.nn.sigmoid(g[:, 1 * HIDDEN:2 * HIDDEN])
        g_g = jnp.tanh(g[:, 2 * HIDDEN:3 * HIDDEN])
        o_g = jax.nn.sigmoid(g[:, 3 * HIDDEN:4 * HIDDEN])
        c = f_g * c + i_g * g_g
        h = o_g * jnp.tanh(c)
        return (h, c), h

    h0 = jnp.zeros((x.shape[0], HIDDEN), jnp.float32)
    c0 = jnp.zeros((x.shape[0], HIDDEN), jnp.float32)
    _, hs = lax.scan(step, (h0, c0), xseq)                     # (L, B, H)
    y = jnp.einsum('lbh,oh->lbo', hs, params['w_fc']) + params['b_fc'].reshape(1, 1, 1)
    lstm_bcl = jnp.transpose(y, (1, 2, 0))                     # (B, 1, L)
    out = outputs * lstm_bcl
    return jnp.transpose(out, (0, 2, 1))                       # (B, L, 1)


if __name__ == "__main__":
    key = jax.random.PRNGKey(0)
    kx, kp = jax.random.split(key)
    x = jax.random.normal(kx, (B, RES_CH, L_IN), dtype=jnp.float32)
    params = init_params(kp)

    out = jax.block_until_ready(seriesnet_forward(x, params))
    assert out.shape == (B, L_OUT, 1), out.shape

    ref = reference_forward(x, params)
    if not jnp.allclose(out, ref, rtol=2e-3, atol=3e-5):
        raise AssertionError(
            f"mismatch vs reference, max abs err={float(jnp.max(jnp.abs(out - ref)))}")
    print("KERNEL_OK")
</pallas_src>

<mosaic_0001>
module attributes {stable_mosaic.version = 11 : i64} {
  func.func @seriesnet_kernel(%arg0: memref<2x8x64xf32, #tpu.memory_space<vmem>>, %arg1: memref<8x248xf32, #tpu.memory_space<vmem>>, %arg2: memref<3x8x1xf32, #tpu.memory_space<vmem>>, %arg3: memref<3x8x1xf32, #tpu.memory_space<vmem>>, %arg4: memref<3x8x24xf32, #tpu.memory_space<vmem>>, %arg5: memref<3x8x1xf32, #tpu.memory_space<vmem>>, %arg6: memref<3x8x8xf32, #tpu.memory_space<vmem>>, %arg7: memref<1x8xf32, #tpu.memory_space<vmem>>, %arg8: memref<1x1xf32, #tpu.memory_space<vmem>>, %arg9: memref<8x80xf32, #tpu.memory_space<vmem>>, %arg10: memref<20x80xf32, #tpu.memory_space<vmem>>, %arg11: memref<1x80xf32, #tpu.memory_space<vmem>>, %arg12: memref<1x20xf32, #tpu.memory_space<vmem>>, %arg13: memref<1x1xf32, #tpu.memory_space<vmem>>, %arg14: memref<2x36xf32, #tpu.memory_space<vmem>>, %arg15: memref<72x80xf32, #tpu.memory_space<vmem>>, %arg16: memref<36x2x20xf32, #tpu.memory_space<vmem>>) attributes {dimension_semantics = [], scalar_prefetch = 0 : i64, scratch_operands = 2 : i64, tpu.core_type = #tpu.core_type<tc>} {
    %cst = arith.constant 0.000000e+00 : f32
    %0 = vector.broadcast %cst : f32 to vector<8x1xf32>
    %c0 = arith.constant 0 : index
    %c0_0 = arith.constant 0 : index
    %c0_1 = arith.constant 0 : index
    %1 = vector.load %arg0[%c0, %c0_0, %c0_1] : memref<2x8x64xf32, #tpu.memory_space<vmem>>, vector<1x8x64xf32>
    %2 = vector.shape_cast %1 : vector<1x8x64xf32> to vector<8x64xf32>
    %3 = tpu.concatenate %0, %2, %0 in 1 : vector<8x1xf32>, vector<8x64xf32>, vector<8x1xf32> -> vector<8x66xf32>
    %4 = vector.extract_strided_slice %3 {offsets = [0, 0], sizes = [8, 36], strides = [1, 1]} : vector<8x66xf32> to vector<8x36xf32>
    %5 = vector.extract_strided_slice %3 {offsets = [0, 1], sizes = [8, 36], strides = [1, 1]} : vector<8x66xf32> to vector<8x36xf32>
    %6 = vector.extract_strided_slice %3 {offsets = [0, 2], sizes = [8, 36], strides = [1, 1]} : vector<8x66xf32> to vector<8x36xf32>
    %7 = vector.extract_strided_slice %3 {offsets = [0, 3], sizes = [8, 36], strides = [1, 1]} : vector<8x66xf32> to vector<8x36xf32>
    %8 = vector.extract_strided_slice %3 {offsets = [0, 4], sizes = [8, 36], strides = [1, 1]} : vector<8x66xf32> to vector<8x36xf32>
    %9 = vector.extract_strided_slice %3 {offsets = [0, 5], sizes = [8, 36], strides = [1, 1]} : vector<8x66xf32> to vector<8x36xf32>
    %10 = vector.extract_strided_slice %3 {offsets = [0, 6], sizes = [8, 36], strides = [1, 1]} : vector<8x66xf32> to vector<8x36xf32>
    %11 = vector.extract_strided_slice %3 {offsets = [0, 7], sizes = [8, 36], strides = [1, 1]} : vector<8x66xf32> to vector<8x36xf32>
    %12 = vector.extract_strided_slice %3 {offsets = [0, 8], sizes = [8, 36], strides = [1, 1]} : vector<8x66xf32> to vector<8x36xf32>
    %13 = vector.extract_strided_slice %3 {offsets = [0, 9], sizes = [8, 36], strides = [1, 1]} : vector<8x66xf32> to vector<8x36xf32>
    %14 = vector.extract_strided_slice %3 {offsets = [0, 10], sizes = [8, 36], strides = [1, 1]} : vector<8x66xf32> to vector<8x36xf32>
    %15 = vector.extract_strided_slice %3 {offsets = [0, 11], sizes = [8, 36], strides = [1, 1]} : vector<8x66xf32> to vector<8x36xf32>
    %16 = vector.extract_strided_slice %3 {offsets = [0, 12], sizes = [8, 36], strides = [1, 1]} : vector<8x66xf32> to vector<8x36xf32>
    %17 = vector.extract_strided_slice %3 {offsets = [0, 13], sizes = [8, 36], strides = [1, 1]} : vector<8x66xf32> to vector<8x36xf32>
    %18 = vector.extract_strided_slice %3 {offsets = [0, 14], sizes = [8, 36], strides = [1, 1]} : vector<8x66xf32> to vector<8x36xf32>
    %19 = vector.extract_strided_slice %3 {offsets = [0, 15], sizes = [8, 36], strides = [1, 1]} : vector<8x66xf32> to vector<8x36xf32>
    %20 = vector.extract_strided_slice %3 {offsets = [0, 16], sizes = [8, 36], strides = [1, 1]} : vector<8x66xf32> to vector<8x36xf32>
    %21 = vector.extract_strided_slice %3 {offsets = [0, 17], sizes = [8, 36], strides = [1, 1]} : vector<8x66xf32> to vector<8x36xf32>
    %22 = vector.extract_strided_slice %3 {offsets = [0, 18], sizes = [8, 36], strides = [1, 1]} : vector<8x66xf32> to vector<8x36xf32>
    %23 = vector.extract_strided_slice %3 {offsets = [0, 19], sizes = [8, 36], strides = [1, 1]} : vector<8x66xf32> to vector<8x36xf32>
    %24 = vector.extract_strided_slice %3 {offsets = [0, 20], sizes = [8, 36], strides = [1, 1]} : vector<8x66xf32> to vector<8x36xf32>
    %25 = vector.extract_strided_slice %3 {offsets = [0, 21], sizes = [8, 36], strides = [1, 1]} : vector<8x66xf32> to vector<8x36xf32>
    %26 = vector.extract_strided_slice %3 {offsets = [0, 22], sizes = [8, 36], strides = [1, 1]} : vector<8x66xf32> to vector<8x36xf32>
    %27 = vector.extract_strided_slice %3 {offsets = [0, 23], sizes = [8, 36], strides = [1, 1]} : vector<8x66xf32> to vector<8x36xf32>
    %28 = vector.extract_strided_slice %3 {offsets = [0, 24], sizes = [8, 36], strides = [1, 1]} : vector<8x66xf32> to vector<8x36xf32>
    %29 = vector.extract_strided_slice %3 {offsets = [0, 25], sizes = [8, 36], strides = [1, 1]} : vector<8x66xf32> to vector<8x36xf32>
    %30 = vector.extract_strided_slice %3 {offsets = [0, 26], sizes = [8, 36], strides = [1, 1]} : vector<8x66xf32> to vector<8x36xf32>
    %31 = vector.extract_strided_slice %3 {offsets = [0, 27], sizes = [8, 36], strides = [1, 1]} : vector<8x66xf32> to vector<8x36xf32>
    %32 = vector.extract_strided_slice %3 {offsets = [0, 28], sizes = [8, 36], strides = [1, 1]} : vector<8x66xf32> to vector<8x36xf32>
    %33 = vector.extract_strided_slice %3 {offsets = [0, 29], sizes = [8, 36], strides = [1, 1]} : vector<8x66xf32> to vector<8x36xf32>
    %34 = vector.extract_strided_slice %3 {offsets = [0, 30], sizes = [8, 36], strides = [1, 1]} : vector<8x66xf32> to vector<8x36xf32>
    %35 = tpu.concatenate %4, %5, %6, %7, %8, %9, %10, %11, %12, %13, %14, %15, %16, %17, %18, %19 in 0 : vector<8x36xf32>, vector<8x36xf32>, vector<8x36xf32>, vector<8x36xf32>, vector<8x36xf32>, vector<8x36xf32>, vector<8x36xf32>, vector<8x36xf32>, vector<8x36xf32>, vector<8x36xf32>, vector<8x36xf32>, vector<8x36xf32>, vector<8x36xf32>, vector<8x36xf32>, vector<8x36xf32>, vector<8x36xf32> -> vector<128x36xf32>
    %36 = tpu.concatenate %20, %21, %22, %23, %24, %25, %26, %27, %28, %29, %30, %31, %32, %33, %34 in 0 : vector<8x36xf32>, vector<8x36xf32>, vector<8x36xf32>, vector<8x36xf32>, vector<8x36xf32>, vector<8x36xf32>, vector<8x36xf32>, vector<8x36xf32>, vector<8x36xf32>, vector<8x36xf32>, vector<8x36xf32>, vector<8x36xf32>, vector<8x36xf32>, vector<8x36xf32>, vector<8x36xf32> -> vector<120x36xf32>
    %37 = tpu.concatenate %35, %36 in 0 : vector<128x36xf32>, vector<120x36xf32> -> vector<248x36xf32>
    %c0_2 = arith.constant 0 : index
    %c0_3 = arith.constant 0 : index
    %38 = vector.load %arg1[%c0_2, %c0_3] : memref<8x248xf32, #tpu.memory_space<vmem>>, vector<8x248xf32>
    %cst_4 = arith.constant dense<0.000000e+00> : vector<8x36xf32>
    %39 = tpu.matmul %38, %37, %cst_4 {dimension_numbers = #tpu.dot_dimension_numbers<[1], [0], [0], [1], [0, 0, 1, 1], [], []>} : vector<8x248xf32>, vector<248x36xf32>, vector<8x36xf32> -> vector<8x36xf32>
    %c1 = arith.constant 1 : index
    %c0_5 = arith.constant 0 : index
    %c0_6 = arith.constant 0 : index
    %40 = vector.load %arg0[%c1, %c0_5, %c0_6] : memref<2x8x64xf32, #tpu.memory_space<vmem>>, vector<1x8x64xf32>
    %41 = vector.shape_cast %40 : vector<1x8x64xf32> to vector<8x64xf32>
    %42 = tpu.concatenate %0, %41, %0 in 1 : vector<8x1xf32>, vector<8x64xf32>, vector<8x1xf32> -> vector<8x66xf32>
    %43 = vector.extract_strided_slice %42 {offsets = [0, 0], sizes = [8, 36], strides = [1, 1]} : vector<8x66xf32> to vector<8x36xf32>
    %44 = vector.extract_strided_slice %42 {offsets = [0, 1], sizes = [8, 36], strides = [1, 1]} : vector<8x66xf32> to vector<8x36xf32>
    %45 = vector.extract_strided_slice %42 {offsets = [0, 2], sizes = [8, 36], strides = [1, 1]} : vector<8x66xf32> to vector<8x36xf32>
    %46 = vector.extract_strided_slice %42 {offsets = [0, 3], sizes = [8, 36], strides = [1, 1]} : vector<8x66xf32> to vector<8x36xf32>
    %47 = vector.extract_strided_slice %42 {offsets = [0, 4], sizes = [8, 36], strides = [1, 1]} : vector<8x66xf32> to vector<8x36xf32>
    %48 = vector.extract_strided_slice %42 {offsets = [0, 5], sizes = [8, 36], strides = [1, 1]} : vector<8x66xf32> to vector<8x36xf32>
    %49 = vector.extract_strided_slice %42 {offsets = [0, 6], sizes = [8, 36], strides = [1, 1]} : vector<8x66xf32> to vector<8x36xf32>
    %50 = vector.extract_strided_slice %42 {offsets = [0, 7], sizes = [8, 36], strides = [1, 1]} : vector<8x66xf32> to vector<8x36xf32>
    %51 = vector.extract_strided_slice %42 {offsets = [0, 8], sizes = [8, 36], strides = [1, 1]} : vector<8x66xf32> to vector<8x36xf32>
    %52 = vector.extract_strided_slice %42 {offsets = [0, 9], sizes = [8, 36], strides = [1, 1]} : vector<8x66xf32> to vector<8x36xf32>
    %53 = vector.extract_strided_slice %42 {offsets = [0, 10], sizes = [8, 36], strides = [1, 1]} : vector<8x66xf32> to vector<8x36xf32>
    %54 = vector.extract_strided_slice %42 {offsets = [0, 11], sizes = [8, 36], strides = [1, 1]} : vector<8x66xf32> to vector<8x36xf32>
    %55 = vector.extract_strided_slice %42 {offsets = [0, 12], sizes = [8, 36], strides = [1, 1]} : vector<8x66xf32> to vector<8x36xf32>
    %56 = vector.extract_strided_slice %42 {offsets = [0, 13], sizes = [8, 36], strides = [1, 1]} : vector<8x66xf32> to vector<8x36xf32>
    %57 = vector.extract_strided_slice %42 {offsets = [0, 14], sizes = [8, 36], strides = [1, 1]} : vector<8x66xf32> to vector<8x36xf32>
    %58 = vector.extract_strided_slice %42 {offsets = [0, 15], sizes = [8, 36], strides = [1, 1]} : vector<8x66xf32> to vector<8x36xf32>
    %59 = vector.extract_strided_slice %42 {offsets = [0, 16], sizes = [8, 36], strides = [1, 1]} : vector<8x66xf32> to vector<8x36xf32>
    %60 = vector.extract_strided_slice %42 {offsets = [0, 17], sizes = [8, 36], strides = [1, 1]} : vector<8x66xf32> to vector<8x36xf32>
    %61 = vector.extract_strided_slice %42 {offsets = [0, 18], sizes = [8, 36], strides = [1, 1]} : vector<8x66xf32> to vector<8x36xf32>
    %62 = vector.extract_strided_slice %42 {offsets = [0, 19], sizes = [8, 36], strides = [1, 1]} : vector<8x66xf32> to vector<8x36xf32>
    %63 = vector.extract_strided_slice %42 {offsets = [0, 20], sizes = [8, 36], strides = [1, 1]} : vector<8x66xf32> to vector<8x36xf32>
    %64 = vector.extract_strided_slice %42 {offsets = [0, 21], sizes = [8, 36], strides = [1, 1]} : vector<8x66xf32> to vector<8x36xf32>
    %65 = vector.extract_strided_slice %42 {offsets = [0, 22], sizes = [8, 36], strides = [1, 1]} : vector<8x66xf32> to vector<8x36xf32>
    %66 = vector.extract_strided_slice %42 {offsets = [0, 23], sizes = [8, 36], strides = [1, 1]} : vector<8x66xf32> to vector<8x36xf32>
    %67 = vector.extract_strided_slice %42 {offsets = [0, 24], sizes = [8, 36], strides = [1, 1]} : vector<8x66xf32> to vector<8x36xf32>
    %68 = vector.extract_strided_slice %42 {offsets = [0, 25], sizes = [8, 36], strides = [1, 1]} : vector<8x66xf32> to vector<8x36xf32>
    %69 = vector.extract_strided_slice %42 {offsets = [0, 26], sizes = [8, 36], strides = [1, 1]} : vector<8x66xf32> to vector<8x36xf32>
    %70 = vector.extract_strided_slice %42 {offsets = [0, 27], sizes = [8, 36], strides = [1, 1]} : vector<8x66xf32> to vector<8x36xf32>
    %71 = vector.extract_strided_slice %42 {offsets = [0, 28], sizes = [8, 36], strides = [1, 1]} : vector<8x66xf32> to vector<8x36xf32>
    %72 = vector.extract_strided_slice %42 {offsets = [0, 29], sizes = [8, 36], strides = [1, 1]} : vector<8x66xf32> to vector<8x36xf32>
    %73 = vector.extract_strided_slice %42 {offsets = [0, 30], sizes = [8, 36], strides = [1, 1]} : vector<8x66xf32> to vector<8x36xf32>
    %74 = tpu.concatenate %43, %44, %45, %46, %47, %48, %49, %50, %51, %52, %53, %54, %55, %56, %57, %58 in 0 : vector<8x36xf32>, vector<8x36xf32>, vector<8x36xf32>, vector<8x36xf32>, vector<8x36xf32>, vector<8x36xf32>, vector<8x36xf32>, vector<8x36xf32>, vector<8x36xf32>, vector<8x36xf32>, vector<8x36xf32>, vector<8x36xf32>, vector<8x36xf32>, vector<8x36xf32>, vector<8x36xf32>, vector<8x36xf32> -> vector<128x36xf32>
    %75 = tpu.concatenate %59, %60, %61, %62, %63, %64, %65, %66, %67, %68, %69, %70, %71, %72, %73 in 0 : vector<8x36xf32>, vector<8x36xf32>, vector<8x36xf32>, vector<8x36xf32>, vector<8x36xf32>, vector<8x36xf32>, vector<8x36xf32>, vector<8x36xf32>, vector<8x36xf32>, vector<8x36xf32>, vector<8x36xf32>, vector<8x36xf32>, vector<8x36xf32>, vector<8x36xf32>, vector<8x36xf32> -> vector<120x36xf32>
    %76 = tpu.concatenate %74, %75 in 0 : vector<128x36xf32>, vector<120x36xf32> -> vector<248x36xf32>
    %c0_7 = arith.constant 0 : index
    %c0_8 = arith.constant 0 : index
    %77 = vector.load %arg1[%c0_7, %c0_8] : memref<8x248xf32, #tpu.memory_space<vmem>>, vector<8x248xf32>
    %cst_9 = arith.constant dense<0.000000e+00> : vector<8x36xf32>
    %78 = tpu.matmul %77, %76, %cst_9 {dimension_numbers = #tpu.dot_dimension_numbers<[1], [0], [0], [1], [0, 0, 1, 1], [], []>} : vector<8x248xf32>, vector<248x36xf32>, vector<8x36xf32> -> vector<8x36xf32>
    %79 = tpu.concatenate %39, %78 in 1 : vector<8x36xf32>, vector<8x36xf32> -> vector<8x72xf32>
    %cst_10 = arith.constant dense<0.000000e+00> : vector<8xf32>
    %80 = vector.multi_reduction <add>, %79, %cst_10 [1] : vector<8x72xf32> to vector<8xf32>
    %81 = vector.shape_cast %80 : vector<8xf32> to vector<8x1xf32>
    %cst_11 = arith.constant 7.200000e+01 : f32
    %82 = vector.broadcast %cst_11 : f32 to vector<8x1xf32>
    %83 = arith.divf %81, %82 : vector<8x1xf32>
    %84 = arith.mulf %79, %79 : vector<8x72xf32>
    %cst_12 = arith.constant dense<0.000000e+00> : vector<8xf32>
    %85 = vector.multi_reduction <add>, %84, %cst_12 [1] : vector<8x72xf32> to vector<8xf32>
    %86 = vector.shape_cast %85 : vector<8xf32> to vector<8x1xf32>
    %cst_13 = arith.constant 7.200000e+01 : f32
    %87 = vector.broadcast %cst_13 : f32 to vector<8x1xf32>
    %88 = arith.divf %86, %87 : vector<8x1xf32>
    %89 = arith.mulf %83, %83 : vector<8x1xf32>
    %90 = arith.subf %88, %89 : vector<8x1xf32>
    %91 = vector.broadcast %83 : vector<8x1xf32> to vector<8x72xf32>
    %92 = arith.subf %79, %91 : vector<8x72xf32>
    %cst_14 = arith.constant 9.99999974E-6 : f32
    %93 = vector.broadcast %cst_14 : f32 to vector<8x1xf32>
    %94 = arith.addf %90, %93 : vector<8x1xf32>
    %95 = math.rsqrt %94 : vector<8x1xf32>
    %96 = vector.broadcast %95 : vector<8x1xf32> to vector<8x72xf32>
    %97 = arith.mulf %92, %96 : vector<8x72xf32>
    %cst_15 = arith.constant 0.000000e+00 : f32
    %98 = vector.broadcast %cst_15 : f32 to vector<8x4xf32>
    %99 = tpu.concatenate %98, %97, %98 in 1 : vector<8x4xf32>, vector<8x72xf32>, vector<8x4xf32> -> vector<8x80xf32>
    %100 = tpu.iota {dimensions = array<i32: 1>} : vector<1x36xi32>
    %101 = tpu.concatenate %100, %100 in 1 : vector<1x36xi32>, vector<1x36xi32> -> vector<1x72xi32>
    %cst_16 = arith.constant 0.000000e+00 : f32
    %102 = vector.broadcast %cst_16 : f32 to vector<8x72xf32>
    %c0_17 = arith.constant 0 : index
    %c0_18 = arith.constant 0 : index
    %c0_19 = arith.constant 0 : index
    %103 = vector.load %arg2[%c0_17, %c0_18, %c0_19] : memref<3x8x1xf32, #tpu.memory_space<vmem>>, vector<1x8x1xf32>
    %104 = vector.shape_cast %103 : vector<1x8x1xf32> to vector<8x1xf32>
    %105 = vector.broadcast %104 : vector<8x1xf32> to vector<8x80xf32>
    %106 = arith.mulf %105, %99 : vector<8x80xf32>
    %c0_20 = arith.constant 0 : index
    %c0_21 = arith.constant 0 : index
    %c0_22 = arith.constant 0 : index
    %107 = vector.load %arg3[%c0_20, %c0_21, %c0_22] : memref<3x8x1xf32, #tpu.memory_space<vmem>>, vector<1x8x1xf32>
    %108 = vector.shape_cast %107 : vector<1x8x1xf32> to vector<8x1xf32>
    %109 = vector.broadcast %108 : vector<8x1xf32> to vector<8x80xf32>
    %110 = arith.addf %106, %109 : vector<8x80xf32>
    %111 = vector.extract_strided_slice %110 {offsets = [0, 3], sizes = [8, 72], strides = [1, 1]} : vector<8x80xf32> to vector<8x72xf32>
    %c-1_i32 = arith.constant -1 : i32
    %112 = vector.broadcast %c-1_i32 : i32 to vector<1x72xi32>
    %113 = arith.addi %101, %112 : vector<1x72xi32>
    %c0_i32 = arith.constant 0 : i32
    %114 = vector.broadcast %c0_i32 : i32 to vector<1x72xi32>
    %115 = arith.cmpi sge, %113, %114 : vector<1x72xi32>
    %c-1_i32_23 = arith.constant -1 : i32
    %116 = vector.broadcast %c-1_i32_23 : i32 to vector<1x72xi32>
    %117 = arith.addi %101, %116 : vector<1x72xi32>
    %c36_i32 = arith.constant 36 : i32
    %118 = vector.broadcast %c36_i32 : i32 to vector<1x72xi32>
    %119 = arith.cmpi slt, %117, %118 : vector<1x72xi32>
    %120 = arith.andi %115, %119 : vector<1x72xi1>
    %cst_24 = arith.constant 0.000000e+00 : f32
    %121 = vector.shape_cast %120 : vector<1x72xi1> to vector<1x72xi1>
    %122 = vector.broadcast %121 : vector<1x72xi1> to vector<8x72xi1>
    %123 = vector.broadcast %cst_24 : f32 to vector<8x72xf32>
    %124 = arith.select %122, %111, %123 : vector<8x72xi1>, vector<8x72xf32>
    %125 = vector.extract_strided_slice %110 {offsets = [0, 4], sizes = [8, 72], strides = [1, 1]} : vector<8x80xf32> to vector<8x72xf32>
    %126 = vector.extract_strided_slice %110 {offsets = [0, 5], sizes = [8, 72], strides = [1, 1]} : vector<8x80xf32> to vector<8x72xf32>
    %c1_i32 = arith.constant 1 : i32
    %127 = vector.broadcast %c1_i32 : i32 to vector<1x72xi32>
    %128 = arith.addi %101, %127 : vector<1x72xi32>
    %c0_i32_25 = arith.constant 0 : i32
    %129 = vector.broadcast %c0_i32_25 : i32 to vector<1x72xi32>
    %130 = arith.cmpi sge, %128, %129 : vector<1x72xi32>
    %c1_i32_26 = arith.constant 1 : i32
    %131 = vector.broadcast %c1_i32_26 : i32 to vector<1x72xi32>
    %132 = arith.addi %101, %131 : vector<1x72xi32>
    %c36_i32_27 = arith.constant 36 : i32
    %133 = vector.broadcast %c36_i32_27 : i32 to vector<1x72xi32>
    %134 = arith.cmpi slt, %132, %133 : vector<1x72xi32>
    %135 = arith.andi %130, %134 : vector<1x72xi1>
    %cst_28 = arith.constant 0.000000e+00 : f32
    %136 = vector.shape_cast %135 : vector<1x72xi1> to vector<1x72xi1>
    %137 = vector.broadcast %136 : vector<1x72xi1> to vector<8x72xi1>
    %138 = vector.broadcast %cst_28 : f32 to vector<8x72xf32>
    %139 = arith.select %137, %126, %138 : vector<8x72xi1>, vector<8x72xf32>
    %140 = tpu.concatenate %124, %125, %139 in 0 : vector<8x72xf32>, vector<8x72xf32>, vector<8x72xf32> -> vector<24x72xf32>
    %c0_29 = arith.constant 0 : index
    %c0_30 = arith.constant 0 : index
    %c0_31 = arith.constant 0 : index
    %141 = vector.load %arg4[%c0_29, %c0_30, %c0_31] : memref<3x8x24xf32, #tpu.memory_space<vmem>>, vector<1x8x24xf32>
    %142 = vector.shape_cast %141 : vector<1x8x24xf32> to vector<8x24xf32>
    %cst_32 = arith.constant dense<0.000000e+00> : vector<8x72xf32>
    %143 = tpu.matmul %142, %140, %cst_32 {dimension_numbers = #tpu.dot_dimension_numbers<[1], [0], [0], [1], [0, 0, 1, 1], [], []>} : vector<8x24xf32>, vector<24x72xf32>, vector<8x72xf32> -> vector<8x72xf32>
    %c0_33 = arith.constant 0 : index
    %c0_34 = arith.constant 0 : index
    %c0_35 = arith.constant 0 : index
    %144 = vector.load %arg5[%c0_33, %c0_34, %c0_35] : memref<3x8x1xf32, #tpu.memory_space<vmem>>, vector<1x8x1xf32>
    %145 = vector.shape_cast %144 : vector<1x8x1xf32> to vector<8x1xf32>
    %146 = vector.broadcast %145 : vector<8x1xf32> to vector<8x72xf32>
    %147 = arith.addf %143, %146 : vector<8x72xf32>
    %c0_36 = arith.constant 0 : index
    %c0_37 = arith.constant 0 : index
    %c0_38 = arith.constant 0 : index
    %148 = vector.load %arg6[%c0_36, %c0_37, %c0_38] : memref<3x8x8xf32, #tpu.memory_space<vmem>>, vector<1x8x8xf32>
    %149 = vector.shape_cast %148 : vector<1x8x8xf32> to vector<8x8xf32>
    %cst_39 = arith.constant dense<0.000000e+00> : vector<8x72xf32>
    %150 = tpu.matmul %149, %147, %cst_39 {dimension_numbers = #tpu.dot_dimension_numbers<[1], [0], [0], [1], [0, 0, 1, 1], [], []>} : vector<8x8xf32>, vector<8x72xf32>, vector<8x72xf32> -> vector<8x72xf32>
    %151 = arith.addf %102, %150 : vector<8x72xf32>
    %c1_40 = arith.constant 1 : index
    %c0_41 = arith.constant 0 : index
    %c0_42 = arith.constant 0 : index
    %152 = vector.load %arg2[%c1_40, %c0_41, %c0_42] : memref<3x8x1xf32, #tpu.memory_space<vmem>>, vector<1x8x1xf32>
    %153 = vector.shape_cast %152 : vector<1x8x1xf32> to vector<8x1xf32>
    %154 = vector.broadcast %153 : vector<8x1xf32> to vector<8x80xf32>
    %155 = arith.mulf %154, %99 : vector<8x80xf32>
    %c1_43 = arith.constant 1 : index
    %c0_44 = arith.constant 0 : index
    %c0_45 = arith.constant 0 : index
    %156 = vector.load %arg3[%c1_43, %c0_44, %c0_45] : memref<3x8x1xf32, #tpu.memory_space<vmem>>, vector<1x8x1xf32>
    %157 = vector.shape_cast %156 : vector<1x8x1xf32> to vector<8x1xf32>
    %158 = vector.broadcast %157 : vector<8x1xf32> to vector<8x80xf32>
    %159 = arith.addf %155, %158 : vector<8x80xf32>
    %160 = vector.extract_strided_slice %159 {offsets = [0, 2], sizes = [8, 72], strides = [1, 1]} : vector<8x80xf32> to vector<8x72xf32>
    %c-2_i32 = arith.constant -2 : i32
    %161 = vector.broadcast %c-2_i32 : i32 to vector<1x72xi32>
    %162 = arith.addi %101, %161 : vector<1x72xi32>
    %c0_i32_46 = arith.constant 0 : i32
    %163 = vector.broadcast %c0_i32_46 : i32 to vector<1x72xi32>
    %164 = arith.cmpi sge, %162, %163 : vector<1x72xi32>
    %c-2_i32_47 = arith.constant -2 : i32
    %165 = vector.broadcast %c-2_i32_47 : i32 to vector<1x72xi32>
    %166 = arith.addi %101, %165 : vector<1x72xi32>
    %c36_i32_48 = arith.constant 36 : i32
    %167 = vector.broadcast %c36_i32_48 : i32 to vector<1x72xi32>
    %168 = arith.cmpi slt, %166, %167 : vector<1x72xi32>
    %169 = arith.andi %164, %168 : vector<1x72xi1>
    %cst_49 = arith.constant 0.000000e+00 : f32
    %170 = vector.shape_cast %169 : vector<1x72xi1> to vector<1x72xi1>
    %171 = vector.broadcast %170 : vector<1x72xi1> to vector<8x72xi1>
    %172 = vector.broadcast %cst_49 : f32 to vector<8x72xf32>
    %173 = arith.select %171, %160, %172 : vector<8x72xi1>, vector<8x72xf32>
    %174 = vector.extract_strided_slice %159 {offsets = [0, 4], sizes = [8, 72], strides = [1, 1]} : vector<8x80xf32> to vector<8x72xf32>
    %175 = vector.extract_strided_slice %159 {offsets = [0, 6], sizes = [8, 72], strides = [1, 1]} : vector<8x80xf32> to vector<8x72xf32>
    %c2_i32 = arith.constant 2 : i32
    %176 = vector.broadcast %c2_i32 : i32 to vector<1x72xi32>
    %177 = arith.addi %101, %176 : vector<1x72xi32>
    %c0_i32_50 = arith.constant 0 : i32
    %178 = vector.broadcast %c0_i32_50 : i32 to vector<1x72xi32>
    %179 = arith.cmpi sge, %177, %178 : vector<1x72xi32>
    %c2_i32_51 = arith.constant 2 : i32
    %180 = vector.broadcast %c2_i32_51 : i32 to vector<1x72xi32>
    %181 = arith.addi %101, %180 : vector<1x72xi32>
    %c36_i32_52 = arith.constant 36 : i32
    %182 = vector.broadcast %c36_i32_52 : i32 to vector<1x72xi32>
    %183 = arith.cmpi slt, %181, %182 : vector<1x72xi32>
    %184 = arith.andi %179, %183 : vector<1x72xi1>
    %cst_53 = arith.constant 0.000000e+00 : f32
    %185 = vector.shape_cast %184 : vector<1x72xi1> to vector<1x72xi1>
    %186 = vector.broadcast %185 : vector<1x72xi1> to vector<8x72xi1>
    %187 = vector.broadcast %cst_53 : f32 to vector<8x72xf32>
    %188 = arith.select %186, %175, %187 : vector<8x72xi1>, vector<8x72xf32>
    %189 = tpu.concatenate %173, %174, %188 in 0 : vector<8x72xf32>, vector<8x72xf32>, vector<8x72xf32> -> vector<24x72xf32>
    %c1_54 = arith.constant 1 : index
    %c0_55 = arith.constant 0 : index
    %c0_56 = arith.constant 0 : index
    %190 = vector.load %arg4[%c1_54, %c0_55, %c0_56] : memref<3x8x24xf32, #tpu.memory_space<vmem>>, vector<1x8x24xf32>
    %191 = vector.shape_cast %190 : vector<1x8x24xf32> to vector<8x24xf32>
    %cst_57 = arith.constant dense<0.000000e+00> : vector<8x72xf32>
    %192 = tpu.matmul %191, %189, %cst_57 {dimension_numbers = #tpu.dot_dimension_numbers<[1], [0], [0], [1], [0, 0, 1, 1], [], []>} : vector<8x24xf32>, vector<24x72xf32>, vector<8x72xf32> -> vector<8x72xf32>
    %c1_58 = arith.constant 1 : index
    %c0_59 = arith.constant 0 : index
    %c0_60 = arith.constant 0 : index
    %193 = vector.load %arg5[%c1_58, %c0_59, %c0_60] : memref<3x8x1xf32, #tpu.memory_space<vmem>>, vector<1x8x1xf32>
    %194 = vector.shape_cast %193 : vector<1x8x1xf32> to vector<8x1xf32>
    %195 = vector.broadcast %194 : vector<8x1xf32> to vector<8x72xf32>
    %196 = arith.addf %192, %195 : vector<8x72xf32>
    %c1_61 = arith.constant 1 : index
    %c0_62 = arith.constant 0 : index
    %c0_63 = arith.constant 0 : index
    %197 = vector.load %arg6[%c1_61, %c0_62, %c0_63] : memref<3x8x8xf32, #tpu.memory_space<vmem>>, vector<1x8x8xf32>
    %198 = vector.shape_cast %197 : vector<1x8x8xf32> to vector<8x8xf32>
    %cst_64 = arith.constant dense<0.000000e+00> : vector<8x72xf32>
    %199 = tpu.matmul %198, %196, %cst_64 {dimension_numbers = #tpu.dot_dimension_numbers<[1], [0], [0], [1], [0, 0, 1, 1], [], []>} : vector<8x8xf32>, vector<8x72xf32>, vector<8x72xf32> -> vector<8x72xf32>
    %200 = arith.addf %151, %199 : vector<8x72xf32>
    %c2 = arith.constant 2 : index
    %c0_65 = arith.constant 0 : index
    %c0_66 = arith.constant 0 : index
    %201 = vector.load %arg2[%c2, %c0_65, %c0_66] : memref<3x8x1xf32, #tpu.memory_space<vmem>>, vector<1x8x1xf32>
    %202 = vector.shape_cast %201 : vector<1x8x1xf32> to vector<8x1xf32>
    %203 = vector.broadcast %202 : vector<8x1xf32> to vector<8x80xf32>
    %204 = arith.mulf %203, %99 : vector<8x80xf32>
    %c2_67 = arith.constant 2 : index
    %c0_68 = arith.constant 0 : index
    %c0_69 = arith.constant 0 : index
    %205 = vector.load %arg3[%c2_67, %c0_68, %c0_69] : memref<3x8x1xf32, #tpu.memory_space<vmem>>, vector<1x8x1xf32>
    %206 = vector.shape_cast %205 : vector<1x8x1xf32> to vector<8x1xf32>
    %207 = vector.broadcast %206 : vector<8x1xf32> to vector<8x80xf32>
    %208 = arith.addf %204, %207 : vector<8x80xf32>
    %209 = vector.extract_strided_slice %208 {offsets = [0, 0], sizes = [8, 72], strides = [1, 1]} : vector<8x80xf32> to vector<8x72xf32>
    %c-4_i32 = arith.constant -4 : i32
    %210 = vector.broadcast %c-4_i32 : i32 to vector<1x72xi32>
    %211 = arith.addi %101, %210 : vector<1x72xi32>
    %c0_i32_70 = arith.constant 0 : i32
    %212 = vector.broadcast %c0_i32_70 : i32 to vector<1x72xi32>
    %213 = arith.cmpi sge, %211, %212 : vector<1x72xi32>
    %c-4_i32_71 = arith.constant -4 : i32
    %214 = vector.broadcast %c-4_i32_71 : i32 to vector<1x72xi32>
    %215 = arith.addi %101, %214 : vector<1x72xi32>
    %c36_i32_72 = arith.constant 36 : i32
    %216 = vector.broadcast %c36_i32_72 : i32 to vector<1x72xi32>
    %217 = arith.cmpi slt, %215, %216 : vector<1x72xi32>
    %218 = arith.andi %213, %217 : vector<1x72xi1>
    %cst_73 = arith.constant 0.000000e+00 : f32
    %219 = vector.shape_cast %218 : vector<1x72xi1> to vector<1x72xi1>
    %220 = vector.broadcast %219 : vector<1x72xi1> to vector<8x72xi1>
    %221 = vector.broadcast %cst_73 : f32 to vector<8x72xf32>
    %222 = arith.select %220, %209, %221 : vector<8x72xi1>, vector<8x72xf32>
    %223 = vector.extract_strided_slice %208 {offsets = [0, 4], sizes = [8, 72], strides = [1, 1]} : vector<8x80xf32> to vector<8x72xf32>
    %224 = vector.extract_strided_slice %208 {offsets = [0, 8], sizes = [8, 72], strides = [1, 1]} : vector<8x80xf32> to vector<8x72xf32>
    %c4_i32 = arith.constant 4 : i32
    %225 = vector.broadcast %c4_i32 : i32 to vector<1x72xi32>
    %226 = arith.addi %101, %225 : vector<1x72xi32>
    %c0_i32_74 = arith.constant 0 : i32
    %227 = vector.broadcast %c0_i32_74 : i32 to vector<1x72xi32>
    %228 = arith.cmpi sge, %226, %227 : vector<1x72xi32>
    %c4_i32_75 = arith.constant 4 : i32
    %229 = vector.broadcast %c4_i32_75 : i32 to vector<1x72xi32>
    %230 = arith.addi %101, %229 : vector<1x72xi32>
    %c36_i32_76 = arith.constant 36 : i32
    %231 = vector.broadcast %c36_i32_76 : i32 to vector<1x72xi32>
    %232 = arith.cmpi slt, %230, %231 : vector<1x72xi32>
    %233 = arith.andi %228, %232 : vector<1x72xi1>
    %cst_77 = arith.constant 0.000000e+00 : f32
    %234 = vector.shape_cast %233 : vector<1x72xi1> to vector<1x72xi1>
    %235 = vector.broadcast %234 : vector<1x72xi1> to vector<8x72xi1>
    %236 = vector.broadcast %cst_77 : f32 to vector<8x72xf32>
    %237 = arith.select %235, %224, %236 : vector<8x72xi1>, vector<8x72xf32>
    %238 = tpu.concatenate %222, %223, %237 in 0 : vector<8x72xf32>, vector<8x72xf32>, vector<8x72xf32> -> vector<24x72xf32>
    %c2_78 = arith.constant 2 : index
    %c0_79 = arith.constant 0 : index
    %c0_80 = arith.constant 0 : index
    %239 = vector.load %arg4[%c2_78, %c0_79, %c0_80] : memref<3x8x24xf32, #tpu.memory_space<vmem>>, vector<1x8x24xf32>
    %240 = vector.shape_cast %239 : vector<1x8x24xf32> to vector<8x24xf32>
    %cst_81 = arith.constant dense<0.000000e+00> : vector<8x72xf32>
    %241 = tpu.matmul %240, %238, %cst_81 {dimension_numbers = #tpu.dot_dimension_numbers<[1], [0], [0], [1], [0, 0, 1, 1], [], []>} : vector<8x24xf32>, vector<24x72xf32>, vector<8x72xf32> -> vector<8x72xf32>
    %c2_82 = arith.constant 2 : index
    %c0_83 = arith.constant 0 : index
    %c0_84 = arith.constant 0 : index
    %242 = vector.load %arg5[%c2_82, %c0_83, %c0_84] : memref<3x8x1xf32, #tpu.memory_space<vmem>>, vector<1x8x1xf32>
    %243 = vector.shape_cast %242 : vector<1x8x1xf32> to vector<8x1xf32>
    %244 = vector.broadcast %243 : vector<8x1xf32> to vector<8x72xf32>
    %245 = arith.addf %241, %244 : vector<8x72xf32>
    %c2_85 = arith.constant 2 : index
    %c0_86 = arith.constant 0 : index
    %c0_87 = arith.constant 0 : index
    %246 = vector.load %arg6[%c2_85, %c0_86, %c0_87] : memref<3x8x8xf32, #tpu.memory_space<vmem>>, vector<1x8x8xf32>
    %247 = vector.shape_cast %246 : vector<1x8x8xf32> to vector<8x8xf32>
    %cst_88 = arith.constant dense<0.000000e+00> : vector<8x72xf32>
    %248 = tpu.matmul %247, %245, %cst_88 {dimension_numbers = #tpu.dot_dimension_numbers<[1], [0], [0], [1], [0, 0, 1, 1], [], []>} : vector<8x8xf32>, vector<8x72xf32>, vector<8x72xf32> -> vector<8x72xf32>
    %249 = arith.addf %200, %248 : vector<8x72xf32>
    %cst_89 = arith.constant 0.000000e+00 : f32
    %250 = vector.broadcast %cst_89 : f32 to vector<8x72xf32>
    %251 = arith.maximumf %249, %250 : vector<8x72xf32>
    %c0_90 = arith.constant 0 : index
    %c0_91 = arith.constant 0 : index
    %252 = vector.load %arg7[%c0_90, %c0_91] : memref<1x8xf32, #tpu.memory_space<vmem>>, vector<1x8xf32>
    %253 = vector.extract_strided_slice %251 {offsets = [0, 0], sizes = [8, 36], strides = [1, 1]} : vector<8x72xf32> to vector<8x36xf32>
    %cst_92 = arith.constant dense<0.000000e+00> : vector<1x36xf32>
    %254 = tpu.matmul %252, %253, %cst_92 {dimension_numbers = #tpu.dot_dimension_numbers<[1], [0], [0], [1], [0, 0, 1, 1], [], []>} : vector<1x8xf32>, vector<8x36xf32>, vector<1x36xf32> -> vector<1x36xf32>
    %c0_93 = arith.constant 0 : index
    %c0_94 = arith.constant 0 : index
    %255 = vector.load %arg7[%c0_93, %c0_94] : memref<1x8xf32, #tpu.memory_space<vmem>>, vector<1x8xf32>
    %256 = vector.extract_strided_slice %251 {offsets = [0, 36], sizes = [8, 36], strides = [1, 1]} : vector<8x72xf32> to vector<8x36xf32>
    %cst_95 = arith.constant dense<0.000000e+00> : vector<1x36xf32>
    %257 = tpu.matmul %255, %256, %cst_95 {dimension_numbers = #tpu.dot_dimension_numbers<[1], [0], [0], [1], [0, 0, 1, 1], [], []>} : vector<1x8xf32>, vector<8x36xf32>, vector<1x36xf32> -> vector<1x36xf32>
    %258 = tpu.concatenate %254, %257 in 0 : vector<1x36xf32>, vector<1x36xf32> -> vector<2x36xf32>
    %c0_96 = arith.constant 0 : index
    %c0_97 = arith.constant 0 : index
    %259 = vector.load %arg8[%c0_96, %c0_97] : memref<1x1xf32, #tpu.memory_space<vmem>>, vector<1x1xf32>
    %260 = vector.broadcast %259 : vector<1x1xf32> to vector<2x36xf32>
    %261 = arith.addf %258, %260 : vector<2x36xf32>
    %262 = tpu.transpose %79, [1, 0] : vector<8x72xf32> -> vector<72x8xf32>
    %c0_98 = arith.constant 0 : index
    %c0_99 = arith.constant 0 : index
    %263 = vector.load %arg9[%c0_98, %c0_99] : memref<8x80xf32, #tpu.memory_space<vmem>>, vector<8x80xf32>
    %cst_100 = arith.constant dense<0.000000e+00> : vector<72x80xf32>
    %264 = tpu.matmul %262, %263, %cst_100 {dimension_numbers = #tpu.dot_dimension_numbers<[1], [0], [0], [1], [0, 0, 1, 1], [], []>} : vector<72x8xf32>, vector<8x80xf32>, vector<72x80xf32> -> vector<72x80xf32>
    %c0_101 = arith.constant 0 : index
    %c0_102 = arith.constant 0 : index
    %265 = vector.load %arg11[%c0_101, %c0_102] : memref<1x80xf32, #tpu.memory_space<vmem>>, vector<1x80xf32>
    %266 = vector.broadcast %265 : vector<1x80xf32> to vector<72x80xf32>
    %267 = arith.addf %264, %266 : vector<72x80xf32>
    %c0_103 = arith.constant 0 : index
    %c0_104 = arith.constant 0 : index
    %268 = vector.load %arg15[%c0_103, %c0_104] : memref<72x80xf32, #tpu.memory_space<vmem>>, vector<72x80xf32>
    tpu.vector_store %arg15[%c0_103, %c0_104], %267 {strides = array<i32>} : memref<72x80xf32, #tpu.memory_space<vmem>>, vector<72x80xf32>,
    %cst_105 = arith.constant 0.000000e+00 : f32
    %269 = vector.broadcast %cst_105 : f32 to vector<2x20xf32>
    %cst_106 = arith.constant 0.000000e+00 : f32
    %270 = vector.broadcast %cst_106 : f32 to vector<2x20xf32>
    %c0_i32_107 = arith.constant 0 : i32
    %c36_i32_108 = arith.constant 36 : i32
    %271 = arith.addi %c0_i32_107, %c36_i32_108 : i32
    %c1_i32_109 = arith.constant 1 : i32
    %272:2 = scf.for %arg17 = %c0_i32_107 to %271 step %c1_i32_109 iter_args(%arg18 = %269, %arg19 = %270) -> (vector<2x20xf32>, vector<2x20xf32>)  : i32 {
      %c0_i32_121 = arith.constant 0 : i32
      %285 = arith.addi %c0_i32_121, %arg17 : i32
      %286 = arith.index_cast %285 : i32 to index
      %c0_122 = arith.constant 0 : index
      %287 = vector.load %arg15[%286, %c0_122] : memref<72x80xf32, #tpu.memory_space<vmem>>, vector<1x80xf32>
      %c36_i32_123 = arith.constant 36 : i32
      %288 = arith.addi %c36_i32_123, %arg17 : i32
      %289 = arith.index_cast %288 : i32 to index
      %c0_124 = arith.constant 0 : index
      %290 = vector.load %arg15[%289, %c0_124] : memref<72x80xf32, #tpu.memory_space<vmem>>, vector<1x80xf32>
      %291 = tpu.concatenate %287, %290 in 0 : vector<1x80xf32>, vector<1x80xf32> -> vector<2x80xf32>
      %c0_125 = arith.constant 0 : index
      %c0_126 = arith.constant 0 : index
      %292 = vector.load %arg10[%c0_125, %c0_126] : memref<20x80xf32, #tpu.memory_space<vmem>>, vector<20x80xf32>
      %cst_127 = arith.constant dense<0.000000e+00> : vector<2x80xf32>
      %293 = tpu.matmul %arg18, %292, %cst_127 {dimension_numbers = #tpu.dot_dimension_numbers<[1], [0], [0], [1], [0, 0, 1, 1], [], []>} : vector<2x20xf32>, vector<20x80xf32>, vector<2x80xf32> -> vector<2x80xf32>
      %294 = arith.addf %291, %293 : vector<2x80xf32>
      %295 = vector.extract_strided_slice %294 {offsets = [0, 0], sizes = [2, 20], strides = [1, 1]} : vector<2x80xf32> to vector<2x20xf32>
      %296 = arith.negf %295 : vector<2x20xf32>
      %297 = math.exp %296 : vector<2x20xf32>
      %cst_128 = arith.constant 1.000000e+00 : f32
      %298 = vector.broadcast %cst_128 : f32 to vector<2x20xf32>
      %299 = arith.addf %298, %297 : vector<2x20xf32>
      %300 = arith.divf %298, %299 : vector<2x20xf32>
      %301 = vector.extract_strided_slice %294 {offsets = [0, 20], sizes = [2, 20], strides = [1, 1]} : vector<2x80xf32> to vector<2x20xf32>
      %302 = arith.negf %301 : vector<2x20xf32>
      %303 = math.exp %302 : vector<2x20xf32>
      %cst_129 = arith.constant 1.000000e+00 : f32
      %304 = vector.broadcast %cst_129 : f32 to vector<2x20xf32>
      %305 = arith.addf %304, %303 : vector<2x20xf32>
      %306 = arith.divf %304, %305 : vector<2x20xf32>
      %307 = vector.extract_strided_slice %294 {offsets = [0, 40], sizes = [2, 20], strides = [1, 1]} : vector<2x80xf32> to vector<2x20xf32>
      %308 = math.tanh %307 : vector<2x20xf32>
      %309 = vector.extract_strided_slice %294 {offsets = [0, 60], sizes = [2, 20], strides = [1, 1]} : vector<2x80xf32> to vector<2x20xf32>
      %310 = arith.negf %309 : vector<2x20xf32>
      %311 = math.exp %310 : vector<2x20xf32>
      %cst_130 = arith.constant 1.000000e+00 : f32
      %312 = vector.broadcast %cst_130 : f32 to vector<2x20xf32>
      %313 = arith.addf %312, %311 : vector<2x20xf32>
      %314 = arith.divf %312, %313 : vector<2x20xf32>
      %315 = arith.mulf %306, %arg19 : vector<2x20xf32>
      %316 = arith.mulf %300, %308 : vector<2x20xf32>
      %317 = arith.addf %315, %316 : vector<2x20xf32>
      %318 = math.tanh %317 : vector<2x20xf32>
      %319 = arith.mulf %314, %318 : vector<2x20xf32>
      %320 = arith.index_cast %arg17 : i32 to index
      %c0_131 = arith.constant 0 : index
      %c0_132 = arith.constant 0 : index
      %321 = vector.load %arg16[%320, %c0_131, %c0_132] : memref<36x2x20xf32, #tpu.memory_space<vmem>>, vector<1x2x20xf32>
      %322 = vector.shape_cast %321 : vector<1x2x20xf32> to vector<2x20xf32>
      %323 = vector.shape_cast %319 : vector<2x20xf32> to vector<1x2x20xf32>
      tpu.vector_store %arg16[%320, %c0_131, %c0_132], %323 {strides = array<i32>} : memref<36x2x20xf32, #tpu.memory_space<vmem>>, vector<1x2x20xf32>,
      scf.yield %319, %317 : vector<2x20xf32>, vector<2x20xf32>
    }
    %c36_i32_110 = arith.constant 36 : i32
    %c0_111 = arith.constant 0 : index
    %c0_112 = arith.constant 0 : index
    %c0_113 = arith.constant 0 : index
    %273 = vector.load %arg16[%c0_111, %c0_112, %c0_113] : memref<36x2x20xf32, #tpu.memory_space<vmem>>, vector<36x2x20xf32>
    %c0_114 = arith.constant 0 : index
    %c0_115 = arith.constant 0 : index
    %274 = vector.load %arg12[%c0_114, %c0_115] : memref<1x20xf32, #tpu.memory_space<vmem>>, vector<1x20xf32>
    %275 = vector.shape_cast %274 : vector<1x20xf32> to vector<1x1x20xf32>
    %276 = vector.broadcast %275 : vector<1x1x20xf32> to vector<36x2x20xf32>
    %277 = arith.mulf %273, %276 : vector<36x2x20xf32>
    %cst_116 = arith.constant dense<0.000000e+00> : vector<36x2xf32>
    %278 = vector.multi_reduction <add>, %277, %cst_116 [2] : vector<36x2x20xf32> to vector<36x2xf32>
    %c0_117 = arith.constant 0 : index
    %c0_118 = arith.constant 0 : index
    %279 = vector.load %arg13[%c0_117, %c0_118] : memref<1x1xf32, #tpu.memory_space<vmem>>, vector<1x1xf32>
    %280 = vector.broadcast %279 : vector<1x1xf32> to vector<36x2xf32>
    %281 = arith.addf %278, %280 : vector<36x2xf32>
    %282 = tpu.transpose %281, [1, 0] : vector<36x2xf32> -> vector<2x36xf32>
    %283 = arith.mulf %261, %282 : vector<2x36xf32>
    %c0_119 = arith.constant 0 : index
    %c0_120 = arith.constant 0 : index
    %284 = vector.load %arg14[%c0_119, %c0_120] : memref<2x36xf32, #tpu.memory_space<vmem>>, vector<2x36xf32>
    tpu.vector_store %arg14[%c0_119, %c0_120], %283 {strides = array<i32>} : memref<2x36xf32, #tpu.memory_space<vmem>>, vector<2x36xf32>,
    return
  }
}

</mosaic_0001>

<llo_original>
// kernel: seriesnet_forward.1
$region0: #{seriesnet_forward.1}
  #allocation0 [shape = 'u32[]', space=smem, size = 0x4, offset = 0x4, fixed_abs, tag = 'smem constant byte address 0x4 - core index']
  #allocation1 [shape = 'u32[144,128]{1,0:T(1,128)}', space=vmem, size = 0x12000, scoped, tag = 'internal scratch']
  #allocation2 [shape = 'f32[72,80]{1,0:T(8,128)}', space=vmem, size = 0x9000, scoped, tag = 'scratch operand']
  #allocation3 [shape = 'f32[36,2,20]{2,1,0:T(2,128)}', space=vmem, size = 0x9000, scoped, tag = 'scratch operand']
  #allocation4 [shape = 'f32[1,1]{1,0:T(1,128)S(1)}', space=vmem, size = 0x200, scoped, tag = 'scoped memory for seriesnet_forward.1']
  #allocation5 [shape = 'f32[1,1]{1,0:T(1,128)S(1)}', space=vmem, size = 0x200, scoped, tag = 'scoped memory for seriesnet_forward.1']
  %s0 = inlined_call_operand.vmem [shape: f32[2,8,64], index: 0, kind: input, shape index: {}]
  %s1 = inlined_call_operand.vmem [shape: f32[8,248], index: 1, kind: input, shape index: {}]
  %s2 = inlined_call_operand.vmem [shape: f32[3,8,1], index: 2, kind: input, shape index: {}]
  %s3 = inlined_call_operand.vmem [shape: f32[3,8,1], index: 3, kind: input, shape index: {}]
  %s4 = inlined_call_operand.vmem [shape: f32[3,8,24], index: 4, kind: input, shape index: {}]
  %s5 = inlined_call_operand.vmem [shape: f32[3,8,1], index: 5, kind: input, shape index: {}]
  %s6 = inlined_call_operand.vmem [shape: f32[3,8,8], index: 6, kind: input, shape index: {}]
  %s7 = inlined_call_operand.hbm [shape: f32[1,8], index: 7, kind: input, shape index: {}]
  %s8 = inlined_call_operand.<no memory space> [shape: f32[1,1], index: 8, kind: input, shape index: {}]
  %s9 = inlined_call_operand.vmem [shape: f32[8,80], index: 9, kind: input, shape index: {}]
  %s10 = inlined_call_operand.vmem [shape: f32[20,80], index: 10, kind: input, shape index: {}]
  %s11 = inlined_call_operand.hbm [shape: f32[1,80], index: 11, kind: input, shape index: {}]
  %s12 = inlined_call_operand.hbm [shape: f32[1,20], index: 12, kind: input, shape index: {}]
  %s13 = inlined_call_operand.<no memory space> [shape: f32[1,1], index: 13, kind: input, shape index: {}]
  %s14 = inlined_call_operand.hbm [shape: f32[2,36], index: 14, kind: output, shape index: {}]
  %s15 = sld [smem:[#allocation0]]
  $region85: #{seriesnet_forward.1} parent=0
    _
  %s17 = ssub.s32 1, %s15
  %s18 = scalar_select 0, %s17, %s15
  %v19 = vstv %s8
  %20 = vst [vmem:[#allocation4] sm:$0x1] %v19
  %v21 = vstv %s13
  %22 = vst [vmem:[#allocation5] sm:$0x1] %v21
  $region1: #{seriesnet_forward.1} parent=0
    #allocation6 [shape = 'u8[512]{0}', space=vmem, size = 0x400, scoped, tag = 'input window, operand 7, single buffered']
    #allocation7 [shape = 's32[1]{0}', space=sflag, size = 0x4, scoped, tag = 'scoped memory for seriesnet_forward.1']
    #allocation8 [shape = 's32[1]{0}', space=sflag, size = 0x4, scoped, tag = 'scoped memory for seriesnet_forward.1']
    #allocation9 [shape = 'u8[512]{0}', space=vmem, size = 0x400, scoped, tag = 'input window, operand 11, single buffered']
    #allocation10 [shape = 's32[1]{0}', space=sflag, size = 0x4, scoped, tag = 'scoped memory for seriesnet_forward.1']
    #allocation11 [shape = 'u8[512]{0}', space=vmem, size = 0x400, scoped, tag = 'input window, operand 12, single buffered']
    #allocation12 [shape = 'u8[1024]{0}', space=vmem, size = 0x400, scoped, tag = 'output window, operand 0, single buffered']
    %23 = vsyncpa [#allocation7], 0
    %24 = vsyncpa [#allocation10], 0
    %25 = vsyncpa [#allocation8], 0
    // Predicated region
    $region2: #{seriesnet_forward.1} parent=1 // pred_check
      _
    $region3: #{seriesnet_forward.1} parent=1 // pred_check_branch
      %27 = sbr.rel (0) target = $region5
    $region4: #{seriesnet_forward.1} parent=1 // pred_region
      _
    $region5: #{seriesnet_forward.1} parent=1 // pred_fallthru
      _
    // Predicated region
    $region6: #{seriesnet_forward.1} parent=1 // pred_check
      _
    $region7: #{seriesnet_forward.1} parent=1 // pred_check_branch
      %29 = sbr.rel (0) target = $region9
    $region8: #{seriesnet_forward.1} parent=1 // pred_region
      _
    $region9: #{seriesnet_forward.1} parent=1 // pred_fallthru
      _
    // Predicated region
    $region10: #{seriesnet_forward.1} parent=1 // pred_check
      _
    $region11: #{seriesnet_forward.1} parent=1 // pred_check_branch
      %31 = sbr.rel (0) target = $region13
    $region12: #{seriesnet_forward.1} parent=1 // pred_region
      _
    $region13: #{seriesnet_forward.1} parent=1 // pred_fallthru
      _
    // Predicated region
    $region14: #{seriesnet_forward.1} parent=1 // pred_check
      _
    $region15: #{seriesnet_forward.1} parent=1 // pred_check_branch
      %33 = sbr.rel (0) target = $region17
    $region16: #{seriesnet_forward.1} parent=1 // pred_region
      _
    $region17: #{seriesnet_forward.1} parent=1 // pred_fallthru
      _
    // Predicated region
    $region18: #{seriesnet_forward.1} parent=1 // pred_check
      _
    $region19: #{seriesnet_forward.1} parent=1 // pred_check_branch
      %35 = sbr.rel (0) target = $region21
    $region20: #{seriesnet_forward.1} parent=1 // pred_region
      _
    $region21: #{seriesnet_forward.1} parent=1 // pred_fallthru
      _
    // Predicated region
    $region22: #{seriesnet_forward.1} parent=1 // pred_check
      _
    $region23: #{seriesnet_forward.1} parent=1 // pred_check_branch
      %37 = sbr.rel (0) target = $region25
    $region24: #{seriesnet_forward.1} parent=1 // pred_region
      _
    $region25: #{seriesnet_forward.1} parent=1 // pred_fallthru
      _
    // Predicated region
    $region26: #{seriesnet_forward.1} parent=1 // pred_check
      _
    $region27: #{seriesnet_forward.1} parent=1 // pred_check_branch
      %39 = sbr.rel (0) target = $region29
    $region28: #{seriesnet_forward.1} parent=1 // pred_region
      _
    $region29: #{seriesnet_forward.1} parent=1 // pred_fallthru
      _
    // Predicated region
    $region30: #{seriesnet_forward.1} parent=1 // pred_check
      _
    $region31: #{seriesnet_forward.1} parent=1 // pred_check_branch
      %41 = sbr.rel (0) target = $region33
    $region32: #{seriesnet_forward.1} parent=1 // pred_region
      %s43 = ssub.s32 16, 16
      %44 = vsyncadd [#allocation7], %s43
      %s46 = sshll.u32 [#allocation6], 4
      %s47 = int_to_ptr.vmem [resolvable:$true] %s46
      %49 = dma.hbm_to_vmem [thread:$0]  %s7, 16, %s47, [#allocation7]
    $region33: #{seriesnet_forward.1} parent=1 // pred_fallthru
      _
    // Predicated region
    $region34: #{seriesnet_forward.1} parent=1 // pred_check
      _
    $region35: #{seriesnet_forward.1} parent=1 // pred_check_branch
      %51 = sbr.rel (0) target = $region37
    $region36: #{seriesnet_forward.1} parent=1 // pred_region
      _
    $region37: #{seriesnet_forward.1} parent=1 // pred_fallthru
      _
    // Predicated region
    $region38: #{seriesnet_forward.1} parent=1 // pred_check
      _
    $region39: #{seriesnet_forward.1} parent=1 // pred_check_branch
      %53 = sbr.rel (0) target = $region41
    $region40: #{seriesnet_forward.1} parent=1 // pred_region
      _
    $region41: #{seriesnet_forward.1} parent=1 // pred_fallthru
      _
    // Predicated region
    $region42: #{seriesnet_forward.1} parent=1 // pred_check
      _
    $region43: #{seriesnet_forward.1} parent=1 // pred_check_branch
      %55 = sbr.rel (0) target = $region45
    $region44: #{seriesnet_forward.1} parent=1 // pred_region
      _
    $region45: #{seriesnet_forward.1} parent=1 // pred_fallthru
      _
    // Predicated region
    $region46: #{seriesnet_forward.1} parent=1 // pred_check
      _
    $region47: #{seriesnet_forward.1} parent=1 // pred_check_branch
      %57 = sbr.rel (0) target = $region49
    $region48: #{seriesnet_forward.1} parent=1 // pred_region
      %s59 = ssub.s32 16, 16
      %60 = vsyncadd [#allocation10], %s59
      %s62 = sshll.u32 [#allocation9], 4
      %s63 = int_to_ptr.vmem [resolvable:$true] %s62
      %65 = dma.hbm_to_vmem [thread:$0]  %s11, 16, %s63, [#allocation10]
    $region49: #{seriesnet_forward.1} parent=1 // pred_fallthru
      _
    // Predicated region
    $region50: #{seriesnet_forward.1} parent=1 // pred_check
      _
    $region51: #{seriesnet_forward.1} parent=1 // pred_check_branch
      %67 = sbr.rel (0) target = $region53
    $region52: #{seriesnet_forward.1} parent=1 // pred_region
      %s69 = ssub.s32 16, 16
      %70 = vsyncadd [#allocation10], %s69
      %s72 = sshll.u32 [#allocation11], 4
      %s73 = int_to_ptr.vmem [resolvable:$true] %s72
      %75 = dma.hbm_to_vmem [thread:$0]  %s12, 16, %s73, [#allocation10]
    $region53: #{seriesnet_forward.1} parent=1 // pred_fallthru
      _
    // Predicated region
    $region54: #{seriesnet_forward.1} parent=1 // pred_check
      _
    $region55: #{seriesnet_forward.1} parent=1 // pred_check_branch
      %77 = sbr.rel (0) target = $region57
    $region56: #{seriesnet_forward.1} parent=1 // pred_region
      _
    $region57: #{seriesnet_forward.1} parent=1 // pred_fallthru
      _
    // Predicated region
    $region58: #{seriesnet_forward.1} parent=1 // pred_check
      _
    $region59: #{seriesnet_forward.1} parent=1 // pred_check_branch
      %79 = sbr.rel (0) target = $region61
    $region60: #{seriesnet_forward.1} parent=1 // pred_region
      %80 = dma.done [#allocation7], 16
    $region61: #{seriesnet_forward.1} parent=1 // pred_fallthru
      _
    // Predicated region
    $region62: #{seriesnet_forward.1} parent=1 // pred_check
      _
    $region63: #{seriesnet_forward.1} parent=1 // pred_check_branch
      %82 = sbr.rel (0) target = $region65
    $region64: #{seriesnet_forward.1} parent=1 // pred_region
      %83 = dma.done [#allocation10], 16
    $region65: #{seriesnet_forward.1} parent=1 // pred_fallthru
      _
    // Predicated region
    $region66: #{seriesnet_forward.1} parent=1 // pred_check
      _
    $region67: #{seriesnet_forward.1} parent=1 // pred_check_branch
      %85 = sbr.rel (0) target = $region69
    $region68: #{seriesnet_forward.1} parent=1 // pred_region
      %86 = dma.done [#allocation10], 16
    $region69: #{seriesnet_forward.1} parent=1 // pred_fallthru
      _
    %v87 = vld [vmem:[%s0] sm:$0xff]
    %89 = vrot.lane.b32.xlu0 %v87, 1
    %v90 = vpop.permute.xlu0 %89
    %vm92 = vcmask 7168
    %v93 = vsel %vm92, 0.0, %v90
    %vm94 = vcmask 531456
    %v95 = vsel %vm94, %v93, 0.0
    %97 = vrot.lane.b32.xlu0 %v95, 127
    %v98 = vpop.permute.xlu0 %97
    %100 = vrot.lane.b32.xlu0 %v95, 126
    %v101 = vpop.permute.xlu0 %100
    %103 = vrot.lane.b32.xlu0 %v95, 125
    %v104 = vpop.permute.xlu0 %103
    %106 = vrot.lane.b32.xlu0 %v95, 124
    %v107 = vpop.permute.xlu0 %106
    %109 = vrot.lane.b32.xlu0 %v95, 123
    %v110 = vpop.permute.xlu0 %109
    %112 = vrot.lane.b32.xlu0 %v95, 122
    %v113 = vpop.permute.xlu0 %112
    %115 = vrot.lane.b32.xlu0 %v95, 121
    %v116 = vpop.permute.xlu0 %115
    %118 = vrot.lane.b32.xlu0 %v95, 120
    %v119 = vpop.permute.xlu0 %118
    %121 = vrot.lane.b32.xlu0 %v95, 119
    %v122 = vpop.permute.xlu0 %121
    %124 = vrot.lane.b32.xlu0 %v95, 118
    %v125 = vpop.permute.xlu0 %124
    %127 = vrot.lane.b32.xlu0 %v95, 117
    %v128 = vpop.permute.xlu0 %127
    %130 = vrot.lane.b32.xlu0 %v95, 116
    %v131 = vpop.permute.xlu0 %130
    %133 = vrot.lane.b32.xlu0 %v95, 115
    %v134 = vpop.permute.xlu0 %133
    %136 = vrot.lane.b32.xlu0 %v95, 114
    %v137 = vpop.permute.xlu0 %136
    %139 = vrot.lane.b32.xlu0 %v95, 113
    %v140 = vpop.permute.xlu0 %139
    %142 = vrot.lane.b32.xlu0 %v95, 112
    %v143 = vpop.permute.xlu0 %142
    %144 = vrot.lane.b32.xlu0 %v98, 112
    %v145 = vpop.permute.xlu0 %144
    %146 = vrot.lane.b32.xlu0 %v101, 112
    %v147 = vpop.permute.xlu0 %146
    %148 = vrot.lane.b32.xlu0 %v104, 112
    %v149 = vpop.permute.xlu0 %148
    %150 = vrot.lane.b32.xlu0 %v107, 112
    %v151 = vpop.permute.xlu0 %150
    %152 = vrot.lane.b32.xlu0 %v110, 112
    %v153 = vpop.permute.xlu0 %152
    %154 = vrot.lane.b32.xlu0 %v113, 112
    %v155 = vpop.permute.xlu0 %154
    %156 = vrot.lane.b32.xlu0 %v116, 112
    %v157 = vpop.permute.xlu0 %156
    %158 = vrot.lane.b32.xlu0 %v119, 112
    %v159 = vpop.permute.xlu0 %158
    %160 = vrot.lane.b32.xlu0 %v122, 112
    %v161 = vpop.permute.xlu0 %160
    %162 = vrot.lane.b32.xlu0 %v125, 112
    %v163 = vpop.permute.xlu0 %162
    %164 = vrot.lane.b32.xlu0 %v128, 112
    %v165 = vpop.permute.xlu0 %164
    %166 = vrot.lane.b32.xlu0 %v131, 112
    %v167 = vpop.permute.xlu0 %166
    %168 = vrot.lane.b32.xlu0 %v134, 112
    %v169 = vpop.permute.xlu0 %168
    %170 = vrot.lane.b32.xlu0 %v137, 112
    %v171 = vpop.permute.xlu0 %170
    %v187 = vld [vmem:[%s1] sm:$0xff]
    %v188 = vld [vmem:[%s1 + $0x8] sm:$0xff]
    %vm189 = vcmask 982016
    %v191 = vsel %vm189, %v188, 0
    %193 = vmatprep.subr.mxu0 0.0
    %194 = vmatpush1.msra.mxu0 %v95
    %195 = vmatprep.subr.mxu0 0.0
    %196 = vmatpush1.msra.mxu0 %v98
    %197 = vmatprep.subr.mxu0 0.0
    %198 = vmatpush1.msra.mxu0 %v101
    %199 = vmatprep.subr.mxu0 0.0
    %200 = vmatpush1.msra.mxu0 %v104
    %201 = vmatprep.subr.mxu0 0.0
    %202 = vmatpush1.msra.mxu0 %v107
    %203 = vmatprep.subr.mxu0 0.0
    %204 = vmatpush1.msra.mxu0 %v110
    %205 = vmatprep.subr.mxu0 0.0
    %206 = vmatpush1.msra.mxu0 %v113
    %207 = vmatprep.subr.mxu0 0.0
    %208 = vmatpush1.msra.mxu0 %v116
    %209 = vmatprep.subr.mxu0 0.0
    %210 = vmatpush1.msra.mxu0 %v119
    %211 = vmatprep.subr.mxu0 0.0
    %212 = vmatpush1.msra.mxu0 %v122
    %213 = vmatprep.subr.mxu0 0.0
    %214 = vmatpush1.msra.mxu0 %v125
    %215 = vmatprep.subr.mxu0 0.0
    %216 = vmatpush1.msra.mxu0 %v128
    %217 = vmatprep.subr.mxu0 0.0
    %218 = vmatpush1.msra.mxu0 %v131
    %219 = vmatprep.subr.mxu0 0.0
    %220 = vmatpush1.msra.mxu0 %v134
    %221 = vmatprep.subr.mxu0 0.0
    %222 = vmatpush1.msra.mxu0 %v137
    %223 = vmatprep.subr.mxu0 0.0
    %224 = vmatpush1.msra.mxu0 %v140
    %225 = vmatprep.subr.mxu0 0.0
    %226 = vmatpush1.msra.mxu0 %v143
    %227 = vmatprep.subr.mxu0 0.0
    %228 = vmatpush1.msra.mxu0 %v145
    %229 = vmatprep.subr.mxu0 0.0
    %230 = vmatpush1.msra.mxu0 %v147
    %231 = vmatprep.subr.mxu0 0.0
    %232 = vmatpush1.msra.mxu0 %v149
    %233 = vmatprep.subr.mxu0 0.0
    %234 = vmatpush1.msra.mxu0 %v151
    %235 = vmatprep.subr.mxu0 0.0
    %236 = vmatpush1.msra.mxu0 %v153
    %237 = vmatprep.subr.mxu0 0.0
    %238 = vmatpush1.msra.mxu0 %v155
    %239 = vmatprep.subr.mxu0 0.0
    %240 = vmatpush1.msra.mxu0 %v157
    %241 = vmatprep.subr.mxu0 0.0
    %242 = vmatpush1.msra.mxu0 %v159
    %243 = vmatprep.subr.mxu0 0.0
    %244 = vmatpush1.msra.mxu0 %v161
    %245 = vmatprep.subr.mxu0 0.0
    %246 = vmatpush1.msra.mxu0 %v163
    %247 = vmatprep.subr.mxu0 0.0
    %248 = vmatpush1.msra.mxu0 %v165
    %249 = vmatprep.subr.mxu0 0.0
    %250 = vmatpush1.msra.mxu0 %v167
    %251 = vmatprep.subr.mxu0 0.0
    %252 = vmatpush1.msra.mxu0 %v169
    %253 = vmatprep.subr.mxu0 0.0
    %254 = vmatpush1.msra.mxu0 %v171
    %255 = vmatprep.subr.mxu0 0.0
    %256 = vmatpush1.msra.mxu0 0.0
    %257 = vmatprep.mubr.f32.mxu0 %v191
    %258 = vmatmul.mubr.f32.gmra.mrb[0].mxu0 %v187
    %v259 = vpop.f32.mrb[0].mxu0
    %v260 = vadd.f32 0.0, %v259
    %v261 = vpop.f32.mrb[0].mxu0
    %262 = vdwg.mxu0
    %s263 = scalar_lea.vmem %s0, 8
    %v264 = vld [vmem:[%s263] sm:$0xff]
    %266 = vrot.lane.b32.xlu0 %v264, 1
    %v267 = vpop.permute.xlu0 %266
    %v269 = vsel %vm92, 0.0, %v267
    %v270 = vsel %vm94, %v269, 0.0
    %272 = vrot.lane.b32.xlu0 %v270, 127
    %v273 = vpop.permute.xlu0 %272
    %275 = vrot.lane.b32.xlu0 %v270, 126
    %v276 = vpop.permute.xlu0 %275
    %278 = vrot.lane.b32.xlu0 %v270, 125
    %v279 = vpop.permute.xlu0 %278
    %281 = vrot.lane.b32.xlu0 %v270, 124
    %v282 = vpop.permute.xlu0 %281
    %284 = vrot.lane.b32.xlu0 %v270, 123
    %v285 = vpop.permute.xlu0 %284
    %287 = vrot.lane.b32.xlu0 %v270, 122
    %v288 = vpop.permute.xlu0 %287
    %290 = vrot.lane.b32.xlu0 %v270, 121
    %v291 = vpop.permute.xlu0 %290
    %293 = vrot.lane.b32.xlu0 %v270, 120
    %v294 = vpop.permute.xlu0 %293
    %296 = vrot.lane.b32.xlu0 %v270, 119
    %v297 = vpop.permute.xlu0 %296
    %299 = vrot.lane.b32.xlu0 %v270, 118
    %v300 = vpop.permute.xlu0 %299
    %302 = vrot.lane.b32.xlu0 %v270, 117
    %v303 = vpop.permute.xlu0 %302
    %305 = vrot.lane.b32.xlu0 %v270, 116
    %v306 = vpop.permute.xlu0 %305
    %308 = vrot.lane.b32.xlu0 %v270, 115
    %v309 = vpop.permute.xlu0 %308
    %311 = vrot.lane.b32.xlu0 %v270, 114
    %v312 = vpop.permute.xlu0 %311
    %314 = vrot.lane.b32.xlu0 %v270, 113
    %v315 = vpop.permute.xlu0 %314
    %317 = vrot.lane.b32.xlu0 %v270, 112
    %v318 = vpop.permute.xlu0 %317
    %319 = vrot.lane.b32.xlu0 %v273, 112
    %v320 = vpop.permute.xlu0 %319
    %321 = vrot.lane.b32.xlu0 %v276, 112
    %v322 = vpop.permute.xlu0 %321
    %323 = vrot.lane.b32.xlu0 %v279, 112
    %v324 = vpop.permute.xlu0 %323
    %325 = vrot.lane.b32.xlu0 %v282, 112
    %v326 = vpop.permute.xlu0 %325
    %327 = vrot.lane.b32.xlu0 %v285, 112
    %v328 = vpop.permute.xlu0 %327
    %329 = vrot.lane.b32.xlu0 %v288, 112
    %v330 = vpop.permute.xlu0 %329
    %331 = vrot.lane.b32.xlu0 %v291, 112
    %v332 = vpop.permute.xlu0 %331
    %333 = vrot.lane.b32.xlu0 %v294, 112
    %v334 = vpop.permute.xlu0 %333
    %335 = vrot.lane.b32.xlu0 %v297, 112
    %v336 = vpop.permute.xlu0 %335
    %337 = vrot.lane.b32.xlu0 %v300, 112
    %v338 = vpop.permute.xlu0 %337
    %339 = vrot.lane.b32.xlu0 %v303, 112
    %v340 = vpop.permute.xlu0 %339
    %341 = vrot.lane.b32.xlu0 %v306, 112
    %v342 = vpop.permute.xlu0 %341
    %343 = vrot.lane.b32.xlu0 %v309, 112
    %v344 = vpop.permute.xlu0 %343
    %345 = vrot.lane.b32.xlu0 %v312, 112
    %v346 = vpop.permute.xlu0 %345
    %362 = vmatprep.subr.mxu0 0.0
    %363 = vmatpush1.msra.mxu0 %v270
    %364 = vmatprep.subr.mxu0 0.0
    %365 = vmatpush1.msra.mxu0 %v273
    %366 = vmatprep.subr.mxu0 0.0
    %367 = vmatpush1.msra.mxu0 %v276
    %368 = vmatprep.subr.mxu0 0.0
    %369 = vmatpush1.msra.mxu0 %v279
    %370 = vmatprep.subr.mxu0 0.0
    %371 = vmatpush1.msra.mxu0 %v282
    %372 = vmatprep.subr.mxu0 0.0
    %373 = vmatpush1.msra.mxu0 %v285
    %374 = vmatprep.subr.mxu0 0.0
    %375 = vmatpush1.msra.mxu0 %v288
    %376 = vmatprep.subr.mxu0 0.0
    %377 = vmatpush1.msra.mxu0 %v291
    %378 = vmatprep.subr.mxu0 0.0
    %379 = vmatpush1.msra.mxu0 %v294
    %380 = vmatprep.subr.mxu0 0.0
    %381 = vmatpush1.msra.mxu0 %v297
    %382 = vmatprep.subr.mxu0 0.0
    %383 = vmatpush1.msra.mxu0 %v300
    %384 = vmatprep.subr.mxu0 0.0
    %385 = vmatpush1.msra.mxu0 %v303
    %386 = vmatprep.subr.mxu0 0.0
    %387 = vmatpush1.msra.mxu0 %v306
    %388 = vmatprep.subr.mxu0 0.0
    %389 = vmatpush1.msra.mxu0 %v309
    %390 = vmatprep.subr.mxu0 0.0
    %391 = vmatpush1.msra.mxu0 %v312
    %392 = vmatprep.subr.mxu0 0.0
    %393 = vmatpush1.msra.mxu0 %v315
    %394 = vmatprep.subr.mxu0 0.0
    %395 = vmatpush1.msra.mxu0 %v318
    %396 = vmatprep.subr.mxu0 0.0
    %397 = vmatpush1.msra.mxu0 %v320
    %398 = vmatprep.subr.mxu0 0.0
    %399 = vmatpush1.msra.mxu0 %v322
    %400 = vmatprep.subr.mxu0 0.0
    %401 = vmatpush1.msra.mxu0 %v324
    %402 = vmatprep.subr.mxu0 0.0
    %403 = vmatpush1.msra.mxu0 %v326
    %404 = vmatprep.subr.mxu0 0.0
    %405 = vmatpush1.msra.mxu0 %v328
    %406 = vmatprep.subr.mxu0 0.0
    %407 = vmatpush1.msra.mxu0 %v330
    %408 = vmatprep.subr.mxu0 0.0
    %409 = vmatpush1.msra.mxu0 %v332
    %410 = vmatprep.subr.mxu0 0.0
    %411 = vmatpush1.msra.mxu0 %v334
    %412 = vmatprep.subr.mxu0 0.0
    %413 = vmatpush1.msra.mxu0 %v336
    %414 = vmatprep.subr.mxu0 0.0
    %415 = vmatpush1.msra.mxu0 %v338
    %416 = vmatprep.subr.mxu0 0.0
    %417 = vmatpush1.msra.mxu0 %v340
    %418 = vmatprep.subr.mxu0 0.0
    %419 = vmatpush1.msra.mxu0 %v342
    %420 = vmatprep.subr.mxu0 0.0
    %421 = vmatpush1.msra.mxu0 %v344
    %422 = vmatprep.subr.mxu0 0.0
    %423 = vmatpush1.msra.mxu0 %v346
    %424 = vmatprep.subr.mxu0 0.0
    %425 = vmatpush1.msra.mxu0 0.0
    %426 = vmatprep.mubr.f32.mxu0 %v191
    %427 = vmatmul.mubr.f32.gmra.mrb[0].mxu0 %v187
    %v428 = vpop.f32.mrb[0].mxu0
    %v429 = vadd.f32 0.0, %v428
    %v430 = vpop.f32.mrb[0].mxu0
    %431 = vdwg.mxu0
    %433 = vrot.lane.b32.xlu0 %v429, 36
    %v434 = vpop.permute.xlu0 %433
    %vm436 = vcmask 293888
    %v437 = vsel %vm436, %v260, %v434
    %vm438 = vcmask 588800
    %v439 = vsel %vm438, %v437, 0.0
    %440 = vadd.xlane.f32.xlu0 %v439
    %v441 = vpop.xlane.xlu0 %440
    %v442 = vrcp.pop 72.0
    %v443 = vmul.f32 %v441, %v442
    %v444 = vmul.f32 %v437, %v437
    %v445 = vsel %vm438, %v444, 0.0
    %446 = vadd.xlane.f32.xlu0 %v445
    %v447 = vpop.xlane.xlu0 %446
    %v448 = vmul.f32 %v447, %v442
    %v449 = vmul.f32 %v443, %v443
    %v450 = vsub.f32 %v448, %v449
    %v451 = vsub.f32 %v437, %v443
    %v452 = vadd.f32 %v450, 1e-05
    %v453 = vrsqrt.pop %v452
    %v454 = vmul.f32 %v451, %v453
    %456 = vrot.lane.b32.xlu0 %v454, 4
    %v457 = vpop.permute.xlu0 %456
    %vm459 = vcmask 31744
    %v460 = vsel %vm459, 0.0, %v457
    %vm461 = vcmask 621568
    %v462 = vsel %vm461, %v460, 0.0
    %v463 = vlaneseq
    %v464 = vand.u32 %v463, 127
    %465 = vrot.lane.b32.xlu0 %v464, 36
    %v466 = vpop.permute.xlu0 %465
    %v467 = vsel %vm436, %v464, %v466
    %v468 = vld [vmem:[%s2] sm:$0xff]
    %470 = vset.pattern.permute.xlu0 0
    %471 = vperm.xlu0 %470, %v468
    %v472 = vpop.permute.xlu0 %471
    %v474 = vmul.f32 %v472, %v462
    %v475 = vld [vmem:[%s3] sm:$0xff]
    %477 = vset.pattern.permute.xlu0 0
    %478 = vperm.xlu0 %477, %v475
    %v479 = vpop.permute.xlu0 %478
    %v481 = vadd.f32 %v474, %v479
    %v482 = vadd.s32 %v467, 4294967295
    %vm483 = vcmp.ge.s32.totalorder %v482, 0
    %vm484 = vcmp.lt.s32.totalorder %v482, 36
    %vm485 = vmand %vm483, %vm484
    %v486 = vsel %vm485, 1, 0
    %v487 = vlaneseq
    %v488 = vshrl.u32 %v487, 7
    %v489 = vsub.s32 0, %v488
    %v490 = vrot.slane %v486, %v489
    %vm491 = vcmp.eq.s32.totalorder %v490, 1
    %493 = vrot.lane.b32.xlu0 %v481, 125
    %v494 = vpop.permute.xlu0 %493
    %v496 = vsel %vm491, %v494, 0.0
    %v497 = vadd.s32 %v467, 1
    %vm498 = vcmp.ge.s32.totalorder %v497, 0
    %vm499 = vcmp.lt.s32.totalorder %v497, 36
    %vm500 = vmand %vm498, %vm499
    %v501 = vsel %vm500, 1, 0
    %v502 = vlaneseq
    %v503 = vshrl.u32 %v502, 7
    %v504 = vsub.s32 0, %v503
    %v505 = vrot.slane %v501, %v504
    %vm506 = vcmp.eq.s32.totalorder %v505, 1
    %507 = vrot.lane.b32.xlu0 %v481, 123
    %v508 = vpop.permute.xlu0 %507
    %v510 = vsel %vm506, %v508, 0.0
    %511 = vrot.lane.b32.xlu0 %v481, 124
    %v512 = vpop.permute.xlu0 %511
    %v514 = vld [vmem:[%s4] sm:$0xff]
    %v515 = vld [vmem:[%s5] sm:$0xff]
    %517 = vset.pattern.permute.xlu0 0
    %518 = vperm.xlu0 %517, %v515
    %v519 = vpop.permute.xlu0 %518
    %vm521 = vcmask 195584
    %v523 = vsel %vm521, %v514, 0
    %525 = vmatprep.subr.mxu0 0.0
    %526 = vmatpush1.msra.mxu0 %v496
    %527 = vmatprep.subr.mxu0 0.0
    %528 = vmatpush1.msra.mxu0 %v512
    %529 = vmatprep.subr.mxu0 0.0
    %530 = vmatpush1.msra.mxu0 %v510
    %531 = vmatprep.subr.mxu0 0.0
    %532 = vmatpush1.msra.mxu0 0.0
    %533 = vmatprep.subr.mxu0 0.0
    %534 = vmatpush1.msra.mxu0 0.0
    %535 = vmatprep.subr.mxu0 0.0
    %536 = vmatpush1.msra.mxu0 0.0
    %537 = vmatprep.subr.mxu0 0.0
    %538 = vmatpush1.msra.mxu0 0.0
    %539 = vmatprep.subr.mxu0 0.0
    %540 = vmatpush1.msra.mxu0 0.0
    %541 = vmatprep.subr.mxu0 0.0
    %542 = vmatpush1.msra.mxu0 0.0
    %543 = vmatprep.subr.mxu0 0.0
    %544 = vmatpush1.msra.mxu0 0.0
    %545 = vmatprep.subr.mxu0 0.0
    %546 = vmatpush1.msra.mxu0 0.0
    %547 = vmatprep.subr.mxu0 0.0
    %548 = vmatpush1.msra.mxu0 0.0
    %549 = vmatprep.subr.mxu0 0.0
    %550 = vmatpush1.msra.mxu0 0.0
    %551 = vmatprep.subr.mxu0 0.0
    %552 = vmatpush1.msra.mxu0 0.0
    %553 = vmatprep.subr.mxu0 0.0
    %554 = vmatpush1.msra.mxu0 0.0
    %555 = vmatprep.subr.mxu0 0.0
    %556 = vmatpush1.msra.mxu0 0.0
    %557 = vmatprep.subr.mxu0 0.0
    %558 = vmatpush1.msra.mxu0 0.0
    %559 = vmatprep.subr.mxu0 0.0
    %560 = vmatpush1.msra.mxu0 0.0
    %561 = vmatprep.subr.mxu0 0.0
    %562 = vmatpush1.msra.mxu0 0.0
    %563 = vmatprep.subr.mxu0 0.0
    %564 = vmatpush1.msra.mxu0 0.0
    %565 = vmatprep.subr.mxu0 0.0
    %566 = vmatpush1.msra.mxu0 0.0
    %567 = vmatprep.subr.mxu0 0.0
    %568 = vmatpush1.msra.mxu0 0.0
    %569 = vmatprep.subr.mxu0 0.0
    %570 = vmatpush1.msra.mxu0 0.0
    %571 = vmatprep.subr.mxu0 0.0
    %572 = vmatpush1.msra.mxu0 0.0
    %573 = vmatprep.subr.mxu0 0.0
    %574 = vmatpush1.msra.mxu0 0.0
    %575 = vmatprep.subr.mxu0 0.0
    %576 = vmatpush1.msra.mxu0 0.0
    %577 = vmatprep.subr.mxu0 0.0
    %578 = vmatpush1.msra.mxu0 0.0
    %579 = vmatprep.subr.mxu0 0.0
    %580 = vmatpush1.msra.mxu0 0.0
    %581 = vmatprep.subr.mxu0 0.0
    %582 = vmatpush1.msra.mxu0 0.0
    %583 = vmatprep.subr.mxu0 0.0
    %584 = vmatpush1.msra.mxu0 0.0
    %585 = vmatprep.subr.mxu0 0.0
    %586 = vmatpush1.msra.mxu0 0.0
    %587 = vmatprep.subr.mxu0 0.0
    %588 = vmatpush1.msra.mxu0 0.0
    %589 = vmatprep.mubr.f32.mxu0 0.0
    %590 = vmatmul.mubr.f32.gmra.mrb[0].mxu0 %v523
    %v591 = vpop.f32.mrb[0].mxu0
    %v592 = vadd.f32 %v519, %v591
    %v593 = vpop.f32.mrb[0].mxu0
    %594 = vdwg.mxu0
    %v595 = vld [vmem:[%s6] sm:$0xff]
    %s596 = scalar_lea.vmem %s2, 8
    %v597 = vld [vmem:[%s596] sm:$0xff]
    %599 = vset.pattern.permute.xlu0 0
    %600 = vperm.xlu0 %599, %v597
    %v601 = vpop.permute.xlu0 %600
    %v603 = vmul.f32 %v601, %v462
    %s604 = scalar_lea.vmem %s3, 8
    %v605 = vld [vmem:[%s604] sm:$0xff]
    %607 = vset.pattern.permute.xlu0 0
    %608 = vperm.xlu0 %607, %v605
    %v609 = vpop.permute.xlu0 %608
    %v611 = vadd.f32 %v603, %v609
    %v612 = vadd.s32 %v467, 4294967294
    %vm613 = vcmp.ge.s32.totalorder %v612, 0
    %vm614 = vcmp.lt.s32.totalorder %v612, 36
    %vm615 = vmand %vm613, %vm614
    %v616 = vsel %vm615, 1, 0
    %v617 = vlaneseq
    %v618 = vshrl.u32 %v617, 7
    %v619 = vsub.s32 0, %v618
    %v620 = vrot.slane %v616, %v619
    %vm621 = vcmp.eq.s32.totalorder %v620, 1
    %623 = vrot.lane.b32.xlu0 %v611, 126
    %v624 = vpop.permute.xlu0 %623
    %v626 = vsel %vm621, %v624, 0.0
    %v627 = vadd.s32 %v467, 2
    %vm628 = vcmp.ge.s32.totalorder %v627, 0
    %vm629 = vcmp.lt.s32.totalorder %v627, 36
    %vm630 = vmand %vm628, %vm629
    %v631 = vsel %vm630, 1, 0
    %v632 = vlaneseq
    %v633 = vshrl.u32 %v632, 7
    %v634 = vsub.s32 0, %v633
    %v635 = vrot.slane %v631, %v634
    %vm636 = vcmp.eq.s32.totalorder %v635, 1
    %637 = vrot.lane.b32.xlu0 %v611, 122
    %v638 = vpop.permute.xlu0 %637
    %v640 = vsel %vm636, %v638, 0.0
    %641 = vrot.lane.b32.xlu0 %v611, 124
    %v642 = vpop.permute.xlu0 %641
    %s644 = scalar_lea.vmem %s4, 8
    %v645 = vld [vmem:[%s644] sm:$0xff]
    %s646 = scalar_lea.vmem %s5, 8
    %v647 = vld [vmem:[%s646] sm:$0xff]
    %649 = vset.pattern.permute.xlu0 0
    %650 = vperm.xlu0 %649, %v647
    %v651 = vpop.permute.xlu0 %650
    %v654 = vsel %vm521, %v645, 0
    %656 = vmatprep.subr.mxu0 0.0
    %657 = vmatpush1.msra.mxu0 %v626
    %658 = vmatprep.subr.mxu0 0.0
    %659 = vmatpush1.msra.mxu0 %v642
    %660 = vmatprep.subr.mxu0 0.0
    %661 = vmatpush1.msra.mxu0 %v640
    %662 = vmatprep.subr.mxu0 0.0
    %663 = vmatpush1.msra.mxu0 0.0
    %664 = vmatprep.subr.mxu0 0.0
    %665 = vmatpush1.msra.mxu0 0.0
    %666 = vmatprep.subr.mxu0 0.0
    %667 = vmatpush1.msra.mxu0 0.0
    %668 = vmatprep.subr.mxu0 0.0
    %669 = vmatpush1.msra.mxu0 0.0
    %670 = vmatprep.subr.mxu0 0.0
    %671 = vmatpush1.msra.mxu0 0.0
    %672 = vmatprep.subr.mxu0 0.0
    %673 = vmatpush1.msra.mxu0 0.0
    %674 = vmatprep.subr.mxu0 0.0
    %675 = vmatpush1.msra.mxu0 0.0
    %676 = vmatprep.subr.mxu0 0.0
    %677 = vmatpush1.msra.mxu0 0.0
    %678 = vmatprep.subr.mxu0 0.0
    %679 = vmatpush1.msra.mxu0 0.0
    %680 = vmatprep.subr.mxu0 0.0
    %681 = vmatpush1.msra.mxu0 0.0
    %682 = vmatprep.subr.mxu0 0.0
    %683 = vmatpush1.msra.mxu0 0.0
    %684 = vmatprep.subr.mxu0 0.0
    %685 = vmatpush1.msra.mxu0 0.0
    %686 = vmatprep.subr.mxu0 0.0
    %687 = vmatpush1.msra.mxu0 0.0
    %688 = vmatprep.subr.mxu0 0.0
    %689 = vmatpush1.msra.mxu0 0.0
    %690 = vmatprep.subr.mxu0 0.0
    %691 = vmatpush1.msra.mxu0 0.0
    %692 = vmatprep.subr.mxu0 0.0
    %693 = vmatpush1.msra.mxu0 0.0
    %694 = vmatprep.subr.mxu0 0.0
    %695 = vmatpush1.msra.mxu0 0.0
    %696 = vmatprep.subr.mxu0 0.0
    %697 = vmatpush1.msra.mxu0 0.0
    %698 = vmatprep.subr.mxu0 0.0
    %699 = vmatpush1.msra.mxu0 0.0
    %700 = vmatprep.subr.mxu0 0.0
    %701 = vmatpush1.msra.mxu0 0.0
    %702 = vmatprep.subr.mxu0 0.0
    %703 = vmatpush1.msra.mxu0 0.0
    %704 = vmatprep.subr.mxu0 0.0
    %705 = vmatpush1.msra.mxu0 0.0
    %706 = vmatprep.subr.mxu0 0.0
    %707 = vmatpush1.msra.mxu0 0.0
    %708 = vmatprep.subr.mxu0 0.0
    %709 = vmatpush1.msra.mxu0 0.0
    %710 = vmatprep.subr.mxu0 0.0
    %711 = vmatpush1.msra.mxu0 0.0
    %712 = vmatprep.subr.mxu0 0.0
    %713 = vmatpush1.msra.mxu0 0.0
    %714 = vmatprep.subr.mxu0 0.0
    %715 = vmatpush1.msra.mxu0 0.0
    %716 = vmatprep.subr.mxu0 0.0
    %717 = vmatpush1.msra.mxu0 0.0
    %718 = vmatprep.subr.mxu0 0.0
    %719 = vmatpush1.msra.mxu0 0.0
    %720 = vmatprep.mubr.f32.mxu0 0.0
    %721 = vmatmul.mubr.f32.gmra.mrb[0].mxu0 %v654
    %v722 = vpop.f32.mrb[0].mxu0
    %v723 = vadd.f32 %v651, %v722
    %v724 = vpop.f32.mrb[0].mxu0
    %725 = vdwg.mxu0
    %s726 = scalar_lea.vmem %s6, 8
    %v727 = vld [vmem:[%s726] sm:$0xff]
    %vm728 = vcmask 64512
    %v730 = vsel %vm728, %v727, 0
    %732 = vmatprep.subr.mxu0 0.0
    %733 = vmatpush1.msra.mxu0 %v723
    %734 = vmatprep.subr.mxu0 0.0
    %735 = vmatpush1.msra.mxu0 0.0
    %736 = vmatprep.subr.mxu0 0.0
    %737 = vmatpush1.msra.mxu0 0.0
    %738 = vmatprep.subr.mxu0 0.0
    %739 = vmatpush1.msra.mxu0 0.0
    %740 = vmatprep.subr.mxu0 0.0
    %741 = vmatpush1.msra.mxu0 0.0
    %742 = vmatprep.subr.mxu0 0.0
    %743 = vmatpush1.msra.mxu0 0.0
    %744 = vmatprep.subr.mxu0 0.0
    %745 = vmatpush1.msra.mxu0 0.0
    %746 = vmatprep.subr.mxu0 0.0
    %747 = vmatpush1.msra.mxu0 0.0
    %748 = vmatprep.subr.mxu0 0.0
    %749 = vmatpush1.msra.mxu0 0.0
    %750 = vmatprep.subr.mxu0 0.0
    %751 = vmatpush1.msra.mxu0 0.0
    %752 = vmatprep.subr.mxu0 0.0
    %753 = vmatpush1.msra.mxu0 0.0
    %754 = vmatprep.subr.mxu0 0.0
    %755 = vmatpush1.msra.mxu0 0.0
    %756 = vmatprep.subr.mxu0 0.0
    %757 = vmatpush1.msra.mxu0 0.0
    %758 = vmatprep.subr.mxu0 0.0
    %759 = vmatpush1.msra.mxu0 0.0
    %760 = vmatprep.subr.mxu0 0.0
    %761 = vmatpush1.msra.mxu0 0.0
    %762 = vmatprep.subr.mxu0 0.0
    %763 = vmatpush1.msra.mxu0 0.0
    %764 = vmatprep.subr.mxu0 0.0
    %765 = vmatpush1.msra.mxu0 0.0
    %766 = vmatprep.subr.mxu0 0.0
    %767 = vmatpush1.msra.mxu0 0.0
    %768 = vmatprep.subr.mxu0 0.0
    %769 = vmatpush1.msra.mxu0 0.0
    %770 = vmatprep.subr.mxu0 0.0
    %771 = vmatpush1.msra.mxu0 0.0
    %772 = vmatprep.subr.mxu0 0.0
    %773 = vmatpush1.msra.mxu0 0.0
    %774 = vmatprep.subr.mxu0 0.0
    %775 = vmatpush1.msra.mxu0 0.0
    %776 = vmatprep.subr.mxu0 0.0
    %777 = vmatpush1.msra.mxu0 0.0
    %778 = vmatprep.subr.mxu0 0.0
    %779 = vmatpush1.msra.mxu0 0.0
    %780 = vmatprep.subr.mxu0 0.0
    %781 = vmatpush1.msra.mxu0 0.0
    %782 = vmatprep.subr.mxu0 0.0
    %783 = vmatpush1.msra.mxu0 0.0
    %784 = vmatprep.subr.mxu0 0.0
    %785 = vmatpush1.msra.mxu0 0.0
    %786 = vmatprep.subr.mxu0 0.0
    %787 = vmatpush1.msra.mxu0 0.0
    %788 = vmatprep.subr.mxu0 0.0
    %789 = vmatpush1.msra.mxu0 0.0
    %790 = vmatprep.subr.mxu0 0.0
    %791 = vmatpush1.msra.mxu0 0.0
    %792 = vmatprep.subr.mxu0 0.0
    %793 = vmatpush1.msra.mxu0 0.0
    %794 = vmatprep.subr.mxu0 0.0
    %795 = vmatpush1.msra.mxu0 0.0
    %796 = vmatprep.mubr.f32.mxu0 0.0
    %797 = vmatmul.mubr.f32.gmra.mrb[0].mxu0 %v730
    %v798 = vpop.f32.mrb[0].mxu0
    %v799 = vadd.f32 0.0, %v798
    %v800 = vpop.f32.mrb[0].mxu0
    %801 = vdwg.mxu0
    %v803 = vsel %vm728, %v595, 0
    %805 = vmatprep.subr.mxu0 0.0
    %806 = vmatpush1.msra.mxu0 %v592
    %807 = vmatprep.subr.mxu0 0.0
    %808 = vmatpush1.msra.mxu0 0.0
    %809 = vmatprep.subr.mxu0 0.0
    %810 = vmatpush1.msra.mxu0 0.0
    %811 = vmatprep.subr.mxu0 0.0
    %812 = vmatpush1.msra.mxu0 0.0
    %813 = vmatprep.subr.mxu0 0.0
    %814 = vmatpush1.msra.mxu0 0.0
    %815 = vmatprep.subr.mxu0 0.0
    %816 = vmatpush1.msra.mxu0 0.0
    %817 = vmatprep.subr.mxu0 0.0
    %818 = vmatpush1.msra.mxu0 0.0
    %819 = vmatprep.subr.mxu0 0.0
    %820 = vmatpush1.msra.mxu0 0.0
    %821 = vmatprep.subr.mxu0 0.0
    %822 = vmatpush1.msra.mxu0 0.0
    %823 = vmatprep.subr.mxu0 0.0
    %824 = vmatpush1.msra.mxu0 0.0
    %825 = vmatprep.subr.mxu0 0.0
    %826 = vmatpush1.msra.mxu0 0.0
    %827 = vmatprep.subr.mxu0 0.0
    %828 = vmatpush1.msra.mxu0 0.0
    %829 = vmatprep.subr.mxu0 0.0
    %830 = vmatpush1.msra.mxu0 0.0
    %831 = vmatprep.subr.mxu0 0.0
    %832 = vmatpush1.msra.mxu0 0.0
    %833 = vmatprep.subr.mxu0 0.0
    %834 = vmatpush1.msra.mxu0 0.0
    %835 = vmatprep.subr.mxu0 0.0
    %836 = vmatpush1.msra.mxu0 0.0
    %837 = vmatprep.subr.mxu0 0.0
    %838 = vmatpush1.msra.mxu0 0.0
    %839 = vmatprep.subr.mxu0 0.0
    %840 = vmatpush1.msra.mxu0 0.0
    %841 = vmatprep.subr.mxu0 0.0
    %842 = vmatpush1.msra.mxu0 0.0
    %843 = vmatprep.subr.mxu0 0.0
    %844 = vmatpush1.msra.mxu0 0.0
    %845 = vmatprep.subr.mxu0 0.0
    %846 = vmatpush1.msra.mxu0 0.0
    %847 = vmatprep.subr.mxu0 0.0
    %848 = vmatpush1.msra.mxu0 0.0
    %849 = vmatprep.subr.mxu0 0.0
    %850 = vmatpush1.msra.mxu0 0.0
    %851 = vmatprep.subr.mxu0 0.0
    %852 = vmatpush1.msra.mxu0 0.0
    %853 = vmatprep.subr.mxu0 0.0
    %854 = vmatpush1.msra.mxu0 0.0
    %855 = vmatprep.subr.mxu0 0.0
    %856 = vmatpush1.msra.mxu0 0.0
    %857 = vmatprep.subr.mxu0 0.0
    %858 = vmatpush1.msra.mxu0 0.0
    %859 = vmatprep.subr.mxu0 0.0
    %860 = vmatpush1.msra.mxu0 0.0
    %861 = vmatprep.subr.mxu0 0.0
    %862 = vmatpush1.msra.mxu0 0.0
    %863 = vmatprep.subr.mxu0 0.0
    %864 = vmatpush1.msra.mxu0 0.0
    %865 = vmatprep.subr.mxu0 0.0
    %866 = vmatpush1.msra.mxu0 0.0
    %867 = vmatprep.subr.mxu0 0.0
    %868 = vmatpush1.msra.mxu0 0.0
    %869 = vmatprep.mubr.f32.mxu0 0.0
    %870 = vmatmul.mubr.f32.gmra.mrb[0].mxu0 %v803
    %v871 = vpop.f32.mrb[0].mxu0
    %v872 = vadd.f32 %v799, %v871
    %v873 = vpop.f32.mrb[0].mxu0
    %874 = vdwg.mxu0
    %s875 = scalar_lea.vmem %s2, 16
    %v876 = vld [vmem:[%s875] sm:$0xff]
    %878 = vset.pattern.permute.xlu0 0
    %879 = vperm.xlu0 %878, %v876
    %v880 = vpop.permute.xlu0 %879
    %v882 = vmul.f32 %v880, %v462
    %s883 = scalar_lea.vmem %s3, 16
    %v884 = vld [vmem:[%s883] sm:$0xff]
    %886 = vset.pattern.permute.xlu0 0
    %887 = vperm.xlu0 %886, %v884
    %v888 = vpop.permute.xlu0 %887
    %v890 = vadd.f32 %v882, %v888
    %v891 = vadd.s32 %v467, 4294967292
    %vm892 = vcmp.ge.s32.totalorder %v891, 0
    %vm893 = vcmp.lt.s32.totalorder %v891, 36
    %vm894 = vmand %vm892, %vm893
    %v895 = vsel %vm894, 1, 0
    %v896 = vlaneseq
    %v897 = vshrl.u32 %v896, 7
    %v898 = vsub.s32 0, %v897
    %v899 = vrot.slane %v895, %v898
    %vm900 = vcmp.eq.s32.totalorder %v899, 1
    %v901 = vsel %vm900, %v890, 0.0
    %v902 = vadd.s32 %v467, 4
    %vm903 = vcmp.ge.s32.totalorder %v902, 0
    %vm904 = vcmp.lt.s32.totalorder %v902, 36
    %vm905 = vmand %vm903, %vm904
    %v906 = vsel %vm905, 1, 0
    %v907 = vlaneseq
    %v908 = vshrl.u32 %v907, 7
    %v909 = vsub.s32 0, %v908
    %v910 = vrot.slane %v906, %v909
    %vm911 = vcmp.eq.s32.totalorder %v910, 1
    %913 = vrot.lane.b32.xlu0 %v890, 120
    %v914 = vpop.permute.xlu0 %913
    %v916 = vsel %vm911, %v914, 0.0
    %917 = vrot.lane.b32.xlu0 %v890, 124
    %v918 = vpop.permute.xlu0 %917
    %s920 = scalar_lea.vmem %s4, 16
    %v921 = vld [vmem:[%s920] sm:$0xff]
    %s922 = scalar_lea.vmem %s5, 16
    %v923 = vld [vmem:[%s922] sm:$0xff]
    %925 = vset.pattern.permute.xlu0 0
    %926 = vperm.xlu0 %925, %v923
    %v927 = vpop.permute.xlu0 %926
    %v930 = vsel %vm521, %v921, 0
    %932 = vmatprep.subr.mxu0 0.0
    %933 = vmatpush1.msra.mxu0 %v901
    %934 = vmatprep.subr.mxu0 0.0
    %935 = vmatpush1.msra.mxu0 %v918
    %936 = vmatprep.subr.mxu0 0.0
    %937 = vmatpush1.msra.mxu0 %v916
    %938 = vmatprep.subr.mxu0 0.0
    %939 = vmatpush1.msra.mxu0 0.0
    %940 = vmatprep.subr.mxu0 0.0
    %941 = vmatpush1.msra.mxu0 0.0
    %942 = vmatprep.subr.mxu0 0.0
    %943 = vmatpush1.msra.mxu0 0.0
    %944 = vmatprep.subr.mxu0 0.0
    %945 = vmatpush1.msra.mxu0 0.0
    %946 = vmatprep.subr.mxu0 0.0
    %947 = vmatpush1.msra.mxu0 0.0
    %948 = vmatprep.subr.mxu0 0.0
    %949 = vmatpush1.msra.mxu0 0.0
    %950 = vmatprep.subr.mxu0 0.0
    %951 = vmatpush1.msra.mxu0 0.0
    %952 = vmatprep.subr.mxu0 0.0
    %953 = vmatpush1.msra.mxu0 0.0
    %954 = vmatprep.subr.mxu0 0.0
    %955 = vmatpush1.msra.mxu0 0.0
    %956 = vmatprep.subr.mxu0 0.0
    %957 = vmatpush1.msra.mxu0 0.0
    %958 = vmatprep.subr.mxu0 0.0
    %959 = vmatpush1.msra.mxu0 0.0
    %960 = vmatprep.subr.mxu0 0.0
    %961 = vmatpush1.msra.mxu0 0.0
    %962 = vmatprep.subr.mxu0 0.0
    %963 = vmatpush1.msra.mxu0 0.0
    %964 = vmatprep.subr.mxu0 0.0
    %965 = vmatpush1.msra.mxu0 0.0
    %966 = vmatprep.subr.mxu0 0.0
    %967 = vmatpush1.msra.mxu0 0.0
    %968 = vmatprep.subr.mxu0 0.0
    %969 = vmatpush1.msra.mxu0 0.0
    %970 = vmatprep.subr.mxu0 0.0
    %971 = vmatpush1.msra.mxu0 0.0
    %972 = vmatprep.subr.mxu0 0.0
    %973 = vmatpush1.msra.mxu0 0.0
    %974 = vmatprep.subr.mxu0 0.0
    %975 = vmatpush1.msra.mxu0 0.0
    %976 = vmatprep.subr.mxu0 0.0
    %977 = vmatpush1.msra.mxu0 0.0
    %978 = vmatprep.subr.mxu0 0.0
    %979 = vmatpush1.msra.mxu0 0.0
    %980 = vmatprep.subr.mxu0 0.0
    %981 = vmatpush1.msra.mxu0 0.0
    %982 = vmatprep.subr.mxu0 0.0
    %983 = vmatpush1.msra.mxu0 0.0
    %984 = vmatprep.subr.mxu0 0.0
    %985 = vmatpush1.msra.mxu0 0.0
    %986 = vmatprep.subr.mxu0 0.0
    %987 = vmatpush1.msra.mxu0 0.0
    %988 = vmatprep.subr.mxu0 0.0
    %989 = vmatpush1.msra.mxu0 0.0
    %990 = vmatprep.subr.mxu0 0.0
    %991 = vmatpush1.msra.mxu0 0.0
    %992 = vmatprep.subr.mxu0 0.0
    %993 = vmatpush1.msra.mxu0 0.0
    %994 = vmatprep.subr.mxu0 0.0
    %995 = vmatpush1.msra.mxu0 0.0
    %996 = vmatprep.mubr.f32.mxu0 0.0
    %997 = vmatmul.mubr.f32.gmra.mrb[0].mxu0 %v930
    %v998 = vpop.f32.mrb[0].mxu0
    %v999 = vadd.f32 %v927, %v998
    %v1000 = vpop.f32.mrb[0].mxu0
    %1001 = vdwg.mxu0
    %s1002 = scalar_lea.vmem %s6, 16
    %v1003 = vld [vmem:[%s1002] sm:$0xff]
    %v1005 = vsel %vm728, %v1003, 0
    %1007 = vmatprep.subr.mxu0 0.0
    %1008 = vmatpush1.msra.mxu0 %v999
    %1009 = vmatprep.subr.mxu0 0.0
    %1010 = vmatpush1.msra.mxu0 0.0
    %1011 = vmatprep.subr.mxu0 0.0
    %1012 = vmatpush1.msra.mxu0 0.0
    %1013 = vmatprep.subr.mxu0 0.0
    %1014 = vmatpush1.msra.mxu0 0.0
    %1015 = vmatprep.subr.mxu0 0.0
    %1016 = vmatpush1.msra.mxu0 0.0
    %1017 = vmatprep.subr.mxu0 0.0
    %1018 = vmatpush1.msra.mxu0 0.0
    %1019 = vmatprep.subr.mxu0 0.0
    %1020 = vmatpush1.msra.mxu0 0.0
    %1021 = vmatprep.subr.mxu0 0.0
    %1022 = vmatpush1.msra.mxu0 0.0
    %1023 = vmatprep.subr.mxu0 0.0
    %1024 = vmatpush1.msra.mxu0 0.0
    %1025 = vmatprep.subr.mxu0 0.0
    %1026 = vmatpush1.msra.mxu0 0.0
    %1027 = vmatprep.subr.mxu0 0.0
    %1028 = vmatpush1.msra.mxu0 0.0
    %1029 = vmatprep.subr.mxu0 0.0
    %1030 = vmatpush1.msra.mxu0 0.0
    %1031 = vmatprep.subr.mxu0 0.0
    %1032 = vmatpush1.msra.mxu0 0.0
    %1033 = vmatprep.subr.mxu0 0.0
    %1034 = vmatpush1.msra.mxu0 0.0
    %1035 = vmatprep.subr.mxu0 0.0
    %1036 = vmatpush1.msra.mxu0 0.0
    %1037 = vmatprep.subr.mxu0 0.0
    %1038 = vmatpush1.msra.mxu0 0.0
    %1039 = vmatprep.subr.mxu0 0.0
    %1040 = vmatpush1.msra.mxu0 0.0
    %1041 = vmatprep.subr.mxu0 0.0
    %1042 = vmatpush1.msra.mxu0 0.0
    %1043 = vmatprep.subr.mxu0 0.0
    %1044 = vmatpush1.msra.mxu0 0.0
    %1045 = vmatprep.subr.mxu0 0.0
    %1046 = vmatpush1.msra.mxu0 0.0
    %1047 = vmatprep.subr.mxu0 0.0
    %1048 = vmatpush1.msra.mxu0 0.0
    %1049 = vmatprep.subr.mxu0 0.0
    %1050 = vmatpush1.msra.mxu0 0.0
    %1051 = vmatprep.subr.mxu0 0.0
    %1052 = vmatpush1.msra.mxu0 0.0
    %1053 = vmatprep.subr.mxu0 0.0
    %1054 = vmatpush1.msra.mxu0 0.0
    %1055 = vmatprep.subr.mxu0 0.0
    %1056 = vmatpush1.msra.mxu0 0.0
    %1057 = vmatprep.subr.mxu0 0.0
    %1058 = vmatpush1.msra.mxu0 0.0
    %1059 = vmatprep.subr.mxu0 0.0
    %1060 = vmatpush1.msra.mxu0 0.0
    %1061 = vmatprep.subr.mxu0 0.0
    %1062 = vmatpush1.msra.mxu0 0.0
    %1063 = vmatprep.subr.mxu0 0.0
    %1064 = vmatpush1.msra.mxu0 0.0
    %1065 = vmatprep.subr.mxu0 0.0
    %1066 = vmatpush1.msra.mxu0 0.0
    %1067 = vmatprep.subr.mxu0 0.0
    %1068 = vmatpush1.msra.mxu0 0.0
    %1069 = vmatprep.subr.mxu0 0.0
    %1070 = vmatpush1.msra.mxu0 0.0
    %1071 = vmatprep.mubr.f32.mxu0 0.0
    %1072 = vmatmul.mubr.f32.gmra.mrb[0].mxu0 %v1005
    %v1073 = vpop.f32.mrb[0].mxu0
    %v1074 = vadd.f32 0.0, %v1073
    %v1075 = vpop.f32.mrb[0].mxu0
    %1076 = vdwg.mxu0
    %v1077 = vadd.f32 %v872, %v1074
    %v1078 = vmax.f32 %v1077, 0.0
    %v1079 = vld [vmem:[#allocation6] sm:$0x1]
    %v1081 = vsel %vm728, %v1079, 0
    %1083 = vmatprep.subr.mxu0 0.0
    %1084 = vmatpush1.msra.mxu0 %v1078
    %1085 = vmatprep.subr.mxu0 0.0
    %1086 = vmatpush1.msra.mxu0 0.0
    %1087 = vmatprep.subr.mxu0 0.0
    %1088 = vmatpush1.msra.mxu0 0.0
    %1089 = vmatprep.subr.mxu0 0.0
    %1090 = vmatpush1.msra.mxu0 0.0
    %1091 = vmatprep.subr.mxu0 0.0
    %1092 = vmatpush1.msra.mxu0 0.0
    %1093 = vmatprep.subr.mxu0 0.0
    %1094 = vmatpush1.msra.mxu0 0.0
    %1095 = vmatprep.subr.mxu0 0.0
    %1096 = vmatpush1.msra.mxu0 0.0
    %1097 = vmatprep.subr.mxu0 0.0
    %1098 = vmatpush1.msra.mxu0 0.0
    %1099 = vmatprep.subr.mxu0 0.0
    %1100 = vmatpush1.msra.mxu0 0.0
    %1101 = vmatprep.subr.mxu0 0.0
    %1102 = vmatpush1.msra.mxu0 0.0
    %1103 = vmatprep.subr.mxu0 0.0
    %1104 = vmatpush1.msra.mxu0 0.0
    %1105 = vmatprep.subr.mxu0 0.0
    %1106 = vmatpush1.msra.mxu0 0.0
    %1107 = vmatprep.subr.mxu0 0.0
    %1108 = vmatpush1.msra.mxu0 0.0
    %1109 = vmatprep.subr.mxu0 0.0
    %1110 = vmatpush1.msra.mxu0 0.0
    %1111 = vmatprep.subr.mxu0 0.0
    %1112 = vmatpush1.msra.mxu0 0.0
    %1113 = vmatprep.subr.mxu0 0.0
    %1114 = vmatpush1.msra.mxu0 0.0
    %1115 = vmatprep.subr.mxu0 0.0
    %1116 = vmatpush1.msra.mxu0 0.0
    %1117 = vmatprep.subr.mxu0 0.0
    %1118 = vmatpush1.msra.mxu0 0.0
    %1119 = vmatprep.subr.mxu0 0.0
    %1120 = vmatpush1.msra.mxu0 0.0
    %1121 = vmatprep.subr.mxu0 0.0
    %1122 = vmatpush1.msra.mxu0 0.0
    %1123 = vmatprep.subr.mxu0 0.0
    %1124 = vmatpush1.msra.mxu0 0.0
    %1125 = vmatprep.subr.mxu0 0.0
    %1126 = vmatpush1.msra.mxu0 0.0
    %1127 = vmatprep.subr.mxu0 0.0
    %1128 = vmatpush1.msra.mxu0 0.0
    %1129 = vmatprep.subr.mxu0 0.0
    %1130 = vmatpush1.msra.mxu0 0.0
    %1131 = vmatprep.subr.mxu0 0.0
    %1132 = vmatpush1.msra.mxu0 0.0
    %1133 = vmatprep.subr.mxu0 0.0
    %1134 = vmatpush1.msra.mxu0 0.0
    %1135 = vmatprep.subr.mxu0 0.0
    %1136 = vmatpush1.msra.mxu0 0.0
    %1137 = vmatprep.subr.mxu0 0.0
    %1138 = vmatpush1.msra.mxu0 0.0
    %1139 = vmatprep.subr.mxu0 0.0
    %1140 = vmatpush1.msra.mxu0 0.0
    %1141 = vmatprep.subr.mxu0 0.0
    %1142 = vmatpush1.msra.mxu0 0.0
    %1143 = vmatprep.subr.mxu0 0.0
    %1144 = vmatpush1.msra.mxu0 0.0
    %1145 = vmatprep.subr.mxu0 0.0
    %1146 = vmatpush1.msra.mxu0 0.0
    %1147 = vmatprep.mubr.f32.mxu0 0.0
    %1148 = vmatmul.mubr.f32.gmra.mrb[0].mxu0 %v1081
    %v1149 = vpop.f32.mrb[0].mxu0
    %v1150 = vadd.f32 0.0, %v1149
    %v1151 = vpop.f32.mrb[0].mxu0
    %1152 = vdwg.mxu0
    %1154 = vrot.lane.b32.xlu0 %v1078, 92
    %v1155 = vpop.permute.xlu0 %1154
    %1157 = vmatprep.subr.mxu0 0.0
    %1158 = vmatpush1.msra.mxu0 %v1155
    %1159 = vmatprep.subr.mxu0 0.0
    %1160 = vmatpush1.msra.mxu0 0.0
    %1161 = vmatprep.subr.mxu0 0.0
    %1162 = vmatpush1.msra.mxu0 0.0
    %1163 = vmatprep.subr.mxu0 0.0
    %1164 = vmatpush1.msra.mxu0 0.0
    %1165 = vmatprep.subr.mxu0 0.0
    %1166 = vmatpush1.msra.mxu0 0.0
    %1167 = vmatprep.subr.mxu0 0.0
    %1168 = vmatpush1.msra.mxu0 0.0
    %1169 = vmatprep.subr.mxu0 0.0
    %1170 = vmatpush1.msra.mxu0 0.0
    %1171 = vmatprep.subr.mxu0 0.0
    %1172 = vmatpush1.msra.mxu0 0.0
    %1173 = vmatprep.subr.mxu0 0.0
    %1174 = vmatpush1.msra.mxu0 0.0
    %1175 = vmatprep.subr.mxu0 0.0
    %1176 = vmatpush1.msra.mxu0 0.0
    %1177 = vmatprep.subr.mxu0 0.0
    %1178 = vmatpush1.msra.mxu0 0.0
    %1179 = vmatprep.subr.mxu0 0.0
    %1180 = vmatpush1.msra.mxu0 0.0
    %1181 = vmatprep.subr.mxu0 0.0
    %1182 = vmatpush1.msra.mxu0 0.0
    %1183 = vmatprep.subr.mxu0 0.0
    %1184 = vmatpush1.msra.mxu0 0.0
    %1185 = vmatprep.subr.mxu0 0.0
    %1186 = vmatpush1.msra.mxu0 0.0
    %1187 = vmatprep.subr.mxu0 0.0
    %1188 = vmatpush1.msra.mxu0 0.0
    %1189 = vmatprep.subr.mxu0 0.0
    %1190 = vmatpush1.msra.mxu0 0.0
    %1191 = vmatprep.subr.mxu0 0.0
    %1192 = vmatpush1.msra.mxu0 0.0
    %1193 = vmatprep.subr.mxu0 0.0
    %1194 = vmatpush1.msra.mxu0 0.0
    %1195 = vmatprep.subr.mxu0 0.0
    %1196 = vmatpush1.msra.mxu0 0.0
    %1197 = vmatprep.subr.mxu0 0.0
    %1198 = vmatpush1.msra.mxu0 0.0
    %1199 = vmatprep.subr.mxu0 0.0
    %1200 = vmatpush1.msra.mxu0 0.0
    %1201 = vmatprep.subr.mxu0 0.0
    %1202 = vmatpush1.msra.mxu0 0.0
    %1203 = vmatprep.subr.mxu0 0.0
    %1204 = vmatpush1.msra.mxu0 0.0
    %1205 = vmatprep.subr.mxu0 0.0
    %1206 = vmatpush1.msra.mxu0 0.0
    %1207 = vmatprep.subr.mxu0 0.0
    %1208 = vmatpush1.msra.mxu0 0.0
    %1209 = vmatprep.subr.mxu0 0.0
    %1210 = vmatpush1.msra.mxu0 0.0
    %1211 = vmatprep.subr.mxu0 0.0
    %1212 = vmatpush1.msra.mxu0 0.0
    %1213 = vmatprep.subr.mxu0 0.0
    %1214 = vmatpush1.msra.mxu0 0.0
    %1215 = vmatprep.subr.mxu0 0.0
    %1216 = vmatpush1.msra.mxu0 0.0
    %1217 = vmatprep.subr.mxu0 0.0
    %1218 = vmatpush1.msra.mxu0 0.0
    %1219 = vmatprep.subr.mxu0 0.0
    %1220 = vmatpush1.msra.mxu0 0.0
    %1221 = vmatprep.mubr.f32.mxu0 0.0
    %1222 = vmatmul.mubr.f32.gmra.mrb[0].mxu0 %v1081
    %v1223 = vpop.f32.mrb[0].mxu0
    %v1224 = vadd.f32 0.0, %v1223
    %v1225 = vpop.f32.mrb[0].mxu0
    %1226 = vdwg.mxu0
    %v1228 = vrot.slane %v1224, 7
    %vm1230 = vcmask 1040384
    %v1231 = vsel %vm1230, %v1150, %v1228
    %v1232 = vld [vmem:[#allocation4] sm:$0x1]
    %v1234 = vlaneseq
    %v1235 = vshrl.u32 %v1234, 7
    %v1236 = vsub.s32 0, %v1235
    %v1237 = vrot.slane %v1232, %v1236
    %1238 = vset.pattern.permute.xlu0 0
    %1239 = vperm.xlu0 %1238, %v1237
    %v1240 = vpop.permute.xlu0 %1239
    %v1242 = vadd.f32 %v1231, %v1240
    %1243 = vxpose.xlu0.b32.start [1/16] %v437, 128
    %1244 = vxpose.xlu0.b32.cont [2/16] 0.0, 128
    %1245 = vxpose.xlu0.b32.cont [3/16] 0.0, 128
    %1246 = vxpose.xlu0.b32.cont [4/16] 0.0, 128
    %1247 = vxpose.xlu0.b32.cont [5/16] 0.0, 128
    %1248 = vxpose.xlu0.b32.cont [6/16] 0.0, 128
    %1249 = vxpose.xlu0.b32.cont [7/16] 0.0, 128
    %1250 = vxpose.xlu0.b32.cont [8/16] 0.0, 128
    %1251 = vxpose.xlu0.b32.cont [9/16] 0.0, 128
    %1252 = vxpose.xlu0.b32.cont [10/16] 0.0, 128
    %1253 = vxpose.xlu0.b32.cont [11/16] 0.0, 128
    %1254 = vxpose.xlu0.b32.cont [12/16] 0.0, 128
    %1255 = vxpose.xlu0.b32.cont [13/16] 0.0, 128
    %1256 = vxpose.xlu0.b32.cont [14/16] 0.0, 128
    %1257 = vxpose.xlu0.b32.cont [15/16] 0.0, 128
    %1258 = vxpose.xlu0.b32.end [16/16] 0.0, 128
    %v1259 = vpop.trf.xlu0
    %v1260 = vpop.trf.xlu0
    %v1261 = vpop.trf.xlu0
    %v1262 = vpop.trf.xlu0
    %v1263 = vpop.trf.xlu0
    %v1264 = vpop.trf.xlu0
    %v1265 = vpop.trf.xlu0
    %v1266 = vpop.trf.xlu0
    %v1267 = vpop.trf.xlu0
    %v1268 = vpop.trf.xlu0
    %v1269 = vpop.trf.xlu0
    %v1270 = vpop.trf.xlu0
    %v1271 = vpop.trf.xlu0
    %v1272 = vpop.trf.xlu0
    %v1273 = vpop.trf.xlu0
    %v1274 = vpop.trf.xlu0
    %v1275 = vld [vmem:[%s9] sm:$0xff]
    %v1276 = vld [vmem:[#allocation9] sm:$0x1]
    %v1278 = vlaneseq
    %v1279 = vshrl.u32 %v1278, 7
    %v1280 = vsub.s32 0, %v1279
    %v1281 = vrot.slane %v1276, %v1280
    %v1284 = vsel %vm728, %v1259, 0
    %v1287 = vsel %vm728, %v1260, 0
    %v1290 = vsel %vm728, %v1261, 0
    %v1293 = vsel %vm728, %v1262, 0
    %v1296 = vsel %vm728, %v1263, 0
    %v1299 = vsel %vm728, %v1264, 0
    %v1302 = vsel %vm728, %v1265, 0
    %v1305 = vsel %vm728, %v1266, 0
    %v1308 = vsel %vm728, %v1267, 0
    %1310 = vmatprep.subr.mxu0 0.0
    %1311 = vmatpush1.msra.mxu0 %v1275
    %1312 = vmatprep.subr.mxu0 0.0
    %1313 = vmatpush1.msra.mxu0 0.0
    %1314 = vmatprep.subr.mxu0 0.0
    %1315 = vmatpush1.msra.mxu0 0.0
    %1316 = vmatprep.subr.mxu0 0.0
    %1317 = vmatpush1.msra.mxu0 0.0
    %1318 = vmatprep.subr.mxu0 0.0
    %1319 = vmatpush1.msra.mxu0 0.0
    %1320 = vmatprep.subr.mxu0 0.0
    %1321 = vmatpush1.msra.mxu0 0.0
    %1322 = vmatprep.subr.mxu0 0.0
    %1323 = vmatpush1.msra.mxu0 0.0
    %1324 = vmatprep.subr.mxu0 0.0
    %1325 = vmatpush1.msra.mxu0 0.0
    %1326 = vmatprep.subr.mxu0 0.0
    %1327 = vmatpush1.msra.mxu0 0.0
    %1328 = vmatprep.subr.mxu0 0.0
    %1329 = vmatpush1.msra.mxu0 0.0
    %1330 = vmatprep.subr.mxu0 0.0
    %1331 = vmatpush1.msra.mxu0 0.0
    %1332 = vmatprep.subr.mxu0 0.0
    %1333 = vmatpush1.msra.mxu0 0.0
    %1334 = vmatprep.subr.mxu0 0.0
    %1335 = vmatpush1.msra.mxu0 0.0
    %1336 = vmatprep.subr.mxu0 0.0
    %1337 = vmatpush1.msra.mxu0 0.0
    %1338 = vmatprep.subr.mxu0 0.0
    %1339 = vmatpush1.msra.mxu0 0.0
    %1340 = vmatprep.subr.mxu0 0.0
    %1341 = vmatpush1.msra.mxu0 0.0
    %1342 = vmatprep.subr.mxu0 0.0
    %1343 = vmatpush1.msra.mxu0 0.0
    %1344 = vmatprep.subr.mxu0 0.0
    %1345 = vmatpush1.msra.mxu0 0.0
    %1346 = vmatprep.subr.mxu0 0.0
    %1347 = vmatpush1.msra.mxu0 0.0
    %1348 = vmatprep.subr.mxu0 0.0
    %1349 = vmatpush1.msra.mxu0 0.0
    %1350 = vmatprep.subr.mxu0 0.0
    %1351 = vmatpush1.msra.mxu0 0.0
    %1352 = vmatprep.subr.mxu0 0.0
    %1353 = vmatpush1.msra.mxu0 0.0
    %1354 = vmatprep.subr.mxu0 0.0
    %1355 = vmatpush1.msra.mxu0 0.0
    %1356 = vmatprep.subr.mxu0 0.0
    %1357 = vmatpush1.msra.mxu0 0.0
    %1358 = vmatprep.subr.mxu0 0.0
    %1359 = vmatpush1.msra.mxu0 0.0
    %1360 = vmatprep.subr.mxu0 0.0
    %1361 = vmatpush1.msra.mxu0 0.0
    %1362 = vmatprep.subr.mxu0 0.0
    %1363 = vmatpush1.msra.mxu0 0.0
    %1364 = vmatprep.subr.mxu0 0.0
    %1365 = vmatpush1.msra.mxu0 0.0
    %1366 = vmatprep.subr.mxu0 0.0
    %1367 = vmatpush1.msra.mxu0 0.0
    %1368 = vmatprep.subr.mxu0 0.0
    %1369 = vmatpush1.msra.mxu0 0.0
    %1370 = vmatprep.subr.mxu0 0.0
    %1371 = vmatpush1.msra.mxu0 0.0
    %1372 = vmatprep.subr.mxu0 0.0
    %1373 = vmatpush1.msra.mxu0 0.0
    %1374 = vmatprep.mubr.f32.mxu0 0.0
    %1375 = vmatmul.mubr.f32.gmra.mrb[0].mxu0 %v1284
    %v1376 = vpop.f32.mrb[0].mxu0
    %v1377 = vadd.f32 %v1281, %v1376
    %v1378 = vpop.f32.mrb[0].mxu0
    %1379 = vmatprep.mubr.f32.mxu0 0.0
    %1380 = vmatmul.mubr.f32.gmra.mrb[0].mxu0 %v1287
    %v1381 = vpop.f32.mrb[0].mxu0
    %v1382 = vadd.f32 %v1281, %v1381
    %v1383 = vpop.f32.mrb[0].mxu0
    %1384 = vmatprep.mubr.f32.mxu0 0.0
    %1385 = vmatmul.mubr.f32.gmra.mrb[0].mxu0 %v1290
    %v1386 = vpop.f32.mrb[0].mxu0
    %v1387 = vadd.f32 %v1281, %v1386
    %v1388 = vpop.f32.mrb[0].mxu0
    %1389 = vmatprep.mubr.f32.mxu0 0.0
    %1390 = vmatmul.mubr.f32.gmra.mrb[0].mxu0 %v1293
    %v1391 = vpop.f32.mrb[0].mxu0
    %v1392 = vadd.f32 %v1281, %v1391
    %v1393 = vpop.f32.mrb[0].mxu0
    %1394 = vmatprep.mubr.f32.mxu0 0.0
    %1395 = vmatmul.mubr.f32.gmra.mrb[0].mxu0 %v1296
    %v1396 = vpop.f32.mrb[0].mxu0
    %v1397 = vadd.f32 %v1281, %v1396
    %v1398 = vpop.f32.mrb[0].mxu0
    %1399 = vmatprep.mubr.f32.mxu0 0.0
    %1400 = vmatmul.mubr.f32.gmra.mrb[0].mxu0 %v1299
    %v1401 = vpop.f32.mrb[0].mxu0
    %v1402 = vadd.f32 %v1281, %v1401
    %v1403 = vpop.f32.mrb[0].mxu0
    %1404 = vmatprep.mubr.f32.mxu0 0.0
    %1405 = vmatmul.mubr.f32.gmra.mrb[0].mxu0 %v1302
    %v1406 = vpop.f32.mrb[0].mxu0
    %v1407 = vadd.f32 %v1281, %v1406
    %v1408 = vpop.f32.mrb[0].mxu0
    %1409 = vmatprep.mubr.f32.mxu0 0.0
    %1410 = vmatmul.mubr.f32.gmra.mrb[0].mxu0 %v1305
    %v1411 = vpop.f32.mrb[0].mxu0
    %v1412 = vadd.f32 %v1281, %v1411
    %v1413 = vpop.f32.mrb[0].mxu0
    %1414 = vmatprep.mubr.f32.mxu0 0.0
    %1415 = vmatmul.mubr.f32.gmra.mrb[0].mxu0 %v1308
    %v1416 = vpop.f32.mrb[0].mxu0
    %v1417 = vadd.f32 %v1281, %v1416
    %v1418 = vpop.f32.mrb[0].mxu0
    %1419 = vdwg.mxu0
    %vm1420 = vcmask 654336
    %1421 = vst.msk [vmem:[#allocation2] sm:$0xff] %vm1420, %v1377
    %1422 = vst.msk [vmem:[#allocation2 + $0x8] sm:$0xff] %vm1420, %v1382
    %1423 = vst.msk [vmem:[#allocation2 + $0x10] sm:$0xff] %vm1420, %v1387
    %1424 = vst.msk [vmem:[#allocation2 + $0x18] sm:$0xff] %vm1420, %v1392
    %1425 = vst.msk [vmem:[#allocation2 + $0x20] sm:$0xff] %vm1420, %v1397
    %1426 = vst.msk [vmem:[#allocation2 + $0x28] sm:$0xff] %vm1420, %v1402
    %1427 = vst.msk [vmem:[#allocation2 + $0x30] sm:$0xff] %vm1420, %v1407
    %1428 = vst.msk [vmem:[#allocation2 + $0x38] sm:$0xff] %vm1420, %v1412
    %1429 = vst.msk [vmem:[#allocation2 + $0x40] sm:$0xff] %vm1420, %v1417
    loop: start=0, step=1, limit=36
    $region70: #{seriesnet_forward.1} parent=1 // loop_pre_header
      _
    $region71: #{seriesnet_forward.1} parent=1 // loop_header
      %s1431 = sphi 0, %s1435
      %p1432 = scmp.ge.s32.totalorder %s1431, 36
      %v1436 = vphi 0.0, %v1554
      %v1437 = vphi 0.0, %v1548
    $region72: #{seriesnet_forward.1} parent=1 // loop_header_branch
      %1434 = sbr.rel (%p1432) target = $region76
    $region73: #{seriesnet_forward.1} parent=1 // loop_body
      %s1438 = scalar_lea.vmem [#allocation2], %s1431
      %v1439 = vld [vmem:[%s1438] sm:$0x1]
      %s1440 = sadd.s32 %s1431, 36
      %s1441 = scalar_lea.vmem [#allocation2], %s1440
      %v1442 = vld [vmem:[%s1441] sm:$0x1]
      %v1444 = vrot.slane %v1442, 7
      %v1446 = vsel %vm1230, %v1439, %v1444
      %v1447 = vld [vmem:[%s10] sm:$0xff]
      %v1448 = vld [vmem:[%s10 + $0x8] sm:$0xff]
      %v1449 = vld [vmem:[%s10 + $0x10] sm:$0xf]
      %1451 = vrot.lane.b32.xlu0 %v1436, 68
      %v1452 = vpop.permute.xlu0 %1451
      %vm1453 = vcmask 162816
      %v1454 = vsel %vm1453, %v1452, 0
      %vm1456 = vcmask 1043456
      %v1458 = vsel %vm1456, %v1449, 0
      %1460 = vmatprep.subr.mxu0 0.0
      %1461 = vmatpush1.msra.mxu0 %v1447
      %1462 = vmatprep.subr.mxu0 0.0
      %1463 = vmatpush1.msra.mxu0 %v1448
      %1464 = vmatprep.subr.mxu0 0.0
      %1465 = vmatpush1.msra.mxu0 %v1458
      %1466 = vmatprep.subr.mxu0 0.0
      %1467 = vmatpush1.msra.mxu0 0.0
      %1468 = vmatprep.subr.mxu0 0.0
      %1469 = vmatpush1.msra.mxu0 0.0
      %1470 = vmatprep.subr.mxu0 0.0
      %1471 = vmatpush1.msra.mxu0 0.0
      %1472 = vmatprep.subr.mxu0 0.0
      %1473 = vmatpush1.msra.mxu0 0.0
      %1474 = vmatprep.subr.mxu0 0.0
      %1475 = vmatpush1.msra.mxu0 0.0
      %1476 = vmatprep.subr.mxu0 0.0
      %1477 = vmatpush1.msra.mxu0 0.0
      %1478 = vmatprep.subr.mxu0 0.0
      %1479 = vmatpush1.msra.mxu0 0.0
      %1480 = vmatprep.subr.mxu0 0.0
      %1481 = vmatpush1.msra.mxu0 0.0
      %1482 = vmatprep.subr.mxu0 0.0
      %1483 = vmatpush1.msra.mxu0 0.0
      %1484 = vmatprep.subr.mxu0 0.0
      %1485 = vmatpush1.msra.mxu0 0.0
      %1486 = vmatprep.subr.mxu0 0.0
      %1487 = vmatpush1.msra.mxu0 0.0
      %1488 = vmatprep.subr.mxu0 0.0
      %1489 = vmatpush1.msra.mxu0 0.0
      %1490 = vmatprep.subr.mxu0 0.0
      %1491 = vmatpush1.msra.mxu0 0.0
      %1492 = vmatprep.subr.mxu0 0.0
      %1493 = vmatpush1.msra.mxu0 0.0
      %1494 = vmatprep.subr.mxu0 0.0
      %1495 = vmatpush1.msra.mxu0 0.0
      %1496 = vmatprep.subr.mxu0 0.0
      %1497 = vmatpush1.msra.mxu0 0.0
      %1498 = vmatprep.subr.mxu0 0.0
      %1499 = vmatpush1.msra.mxu0 0.0
      %1500 = vmatprep.subr.mxu0 0.0
      %1501 = vmatpush1.msra.mxu0 0.0
      %1502 = vmatprep.subr.mxu0 0.0
      %1503 = vmatpush1.msra.mxu0 0.0
      %1504 = vmatprep.subr.mxu0 0.0
      %1505 = vmatpush1.msra.mxu0 0.0
      %1506 = vmatprep.subr.mxu0 0.0
      %1507 = vmatpush1.msra.mxu0 0.0
      %1508 = vmatprep.subr.mxu0 0.0
      %1509 = vmatpush1.msra.mxu0 0.0
      %1510 = vmatprep.subr.mxu0 0.0
      %1511 = vmatpush1.msra.mxu0 0.0
      %1512 = vmatprep.subr.mxu0 0.0
      %1513 = vmatpush1.msra.mxu0 0.0
      %1514 = vmatprep.subr.mxu0 0.0
      %1515 = vmatpush1.msra.mxu0 0.0
      %1516 = vmatprep.subr.mxu0 0.0
      %1517 = vmatpush1.msra.mxu0 0.0
      %1518 = vmatprep.subr.mxu0 0.0
      %1519 = vmatpush1.msra.mxu0 0.0
      %1520 = vmatprep.subr.mxu0 0.0
      %1521 = vmatpush1.msra.mxu0 0.0
      %1522 = vmatprep.subr.mxu0 0.0
      %1523 = vmatpush1.msra.mxu0 0.0
      %1524 = vmatprep.mubr.f32.mxu0 0.0
      %1525 = vmatmul.mubr.f32.gmra.mrb[0].mxu0 %v1454
      %v1526 = vpop.f32.mrb[0].mxu0
      %v1527 = vadd.f32 0.0, %v1526
      %v1528 = vpop.f32.mrb[0].mxu0
      %1529 = vdwg.mxu0
      %v1530 = vadd.f32 %v1446, %v1527
      %v1531 = vxor.u32 %v1530, 2147483648
      %v1532 = vmul.f32 %v1531, 1.442695
      %v1533 = vpow.pop %v1532
      %v1534 = vadd.f32 %v1533, 1.0
      %v1535 = vrcp.pop %v1534
      %v1536 = vmul.f32 1.0, %v1535
      %v1537 = vtanh.pop %v1530
      %v1538 = vmul.f32 %v1536, %v1437
      %1540 = vrot.lane.b32.xlu0 %v1537, 88
      %v1541 = vpop.permute.xlu0 %1540
      %v1543 = vmul.f32 %v1536, %v1541
      %1545 = vrot.lane.b32.xlu0 %v1543, 20
      %v1546 = vpop.permute.xlu0 %1545
      %v1548 = vadd.f32 %v1538, %v1546
      %v1549 = vtanh.pop %v1548
      %1551 = vrot.lane.b32.xlu0 %v1549, 40
      %v1552 = vpop.permute.xlu0 %1551
      %v1554 = vmul.f32 %v1536, %v1552
      %1556 = vrot.lane.b32.xlu0 %v1554, 68
      %v1557 = vpop.permute.xlu0 %1556
      %s1559 = smul.u32 %s1431, 2
      %s1560 = scalar_lea.vmem [#allocation3], %s1559
      %vm1561 = vcmask 156672
      %1562 = vst.msk [vmem:[%s1560] sm:$0x3] %vm1561, %v1557
    $region74: #{seriesnet_forward.1} parent=1 // loop_footer
      %s1435 = sadd.s32 1, %s1431
    $region75: #{seriesnet_forward.1} parent=1 // loop_footer_branch
      %1430 = sbr.rel target = $region71
    $region76: #{seriesnet_forward.1} parent=1 // loop_exit
      _
    %v1563 = vld [vmem:[#allocation3] sm:$0x3]
    %v1564 = vld [vmem:[#allocation3 + $0x2] sm:$0x3]
    %v1565 = vld [vmem:[#allocation3 + $0x4] sm:$0x3]
    %v1566 = vld [vmem:[#allocation3 + $0x6] sm:$0x3]
    %v1567 = vld [vmem:[#allocation3 + $0x8] sm:$0x3]
    %v1568 = vld [vmem:[#allocation3 + $0xa] sm:$0x3]
    %v1569 = vld [vmem:[#allocation3 + $0xc] sm:$0x3]
    %v1570 = vld [vmem:[#allocation3 + $0xe] sm:$0x3]
    %v1571 = vld [vmem:[#allocation3 + $0x10] sm:$0x3]
    %v1572 = vld [vmem:[#allocation3 + $0x12] sm:$0x3]
    %v1573 = vld [vmem:[#allocation3 + $0x14] sm:$0x3]
    %v1574 = vld [vmem:[#allocation3 + $0x16] sm:$0x3]
    %v1575 = vld [vmem:[#allocation3 + $0x18] sm:$0x3]
    %v1576 = vld [vmem:[#allocation3 + $0x1a] sm:$0x3]
    %v1577 = vld [vmem:[#allocation3 + $0x1c] sm:$0x3]
    %v1578 = vld [vmem:[#allocation3 + $0x1e] sm:$0x3]
    %v1579 = vld [vmem:[#allocation3 + $0x20] sm:$0x3]
    %v1580 = vld [vmem:[#allocation3 + $0x22] sm:$0x3]
    %v1581 = vld [vmem:[#allocation3 + $0x24] sm:$0x3]
    %v1582 = vld [vmem:[#allocation3 + $0x26] sm:$0x3]
    %v1583 = vld [vmem:[#allocation3 + $0x28] sm:$0x3]
    %v1584 = vld [vmem:[#allocation3 + $0x2a] sm:$0x3]
    %v1585 = vld [vmem:[#allocation3 + $0x2c] sm:$0x3]
    %v1586 = vld [vmem:[#allocation3 + $0x2e] sm:$0x3]
    %v1587 = vld [vmem:[#allocation3 + $0x30] sm:$0x3]
    %v1588 = vld [vmem:[#allocation3 + $0x32] sm:$0x3]
    %v1589 = vld [vmem:[#allocation3 + $0x34] sm:$0x3]
    %v1590 = vld [vmem:[#allocation3 + $0x36] sm:$0x3]
    %v1591 = vld [vmem:[#allocation3 + $0x38] sm:$0x3]
    %v1592 = vld [vmem:[#allocation3 + $0x3a] sm:$0x3]
    %v1593 = vld [vmem:[#allocation3 + $0x3c] sm:$0x3]
    %v1594 = vld [vmem:[#allocation3 + $0x3e] sm:$0x3]
    %v1595 = vld [vmem:[#allocation3 + $0x40] sm:$0x3]
    %v1596 = vld [vmem:[#allocation3 + $0x42] sm:$0x3]
    %v1597 = vld [vmem:[#allocation3 + $0x44] sm:$0x3]
    %v1598 = vld [vmem:[#allocation3 + $0x46] sm:$0x3]
    %v1599 = vld [vmem:[#allocation11] sm:$0x1]
    %v1601 = vlaneseq
    %v1602 = vshrl.u32 %v1601, 7
    %v1603 = vsub.s32 0, %v1602
    %v1604 = vrot.slane %v1599, %v1603
    %v1606 = vmul.f32 %v1563, %v1604
    %v1607 = vmul.f32 %v1564, %v1604
    %v1608 = vmul.f32 %v1565, %v1604
    %v1609 = vmul.f32 %v1566, %v1604
    %v1610 = vmul.f32 %v1567, %v1604
    %v1611 = vmul.f32 %v1568, %v1604
    %v1612 = vmul.f32 %v1569, %v1604
    %v1613 = vmul.f32 %v1570, %v1604
    %v1614 = vmul.f32 %v1571, %v1604
    %v1615 = vmul.f32 %v1572, %v1604
    %v1616 = vmul.f32 %v1573, %v1604
    %v1617 = vmul.f32 %v1574, %v1604
    %v1618 = vmul.f32 %v1575, %v1604
    %v1619 = vmul.f32 %v1576, %v1604
    %v1620 = vmul.f32 %v1577, %v1604
    %v1621 = vmul.f32 %v1578, %v1604
    %v1622 = vmul.f32 %v1579, %v1604
    %v1623 = vmul.f32 %v1580, %v1604
    %v1624 = vmul.f32 %v1581, %v1604
    %v1625 = vmul.f32 %v1582, %v1604
    %v1626 = vmul.f32 %v1583, %v1604
    %v1627 = vmul.f32 %v1584, %v1604
    %v1628 = vmul.f32 %v1585, %v1604
    %v1629 = vmul.f32 %v1586, %v1604
    %v1630 = vmul.f32 %v1587, %v1604
    %v1631 = vmul.f32 %v1588, %v1604
    %v1632 = vmul.f32 %v1589, %v1604
    %v1633 = vmul.f32 %v1590, %v1604
    %v1634 = vmul.f32 %v1591, %v1604
    %v1635 = vmul.f32 %v1592, %v1604
    %v1636 = vmul.f32 %v1593, %v1604
    %v1637 = vmul.f32 %v1594, %v1604
    %v1638 = vmul.f32 %v1595, %v1604
    %v1639 = vmul.f32 %v1596, %v1604
    %v1640 = vmul.f32 %v1597, %v1604
    %v1641 = vmul.f32 %v1598, %v1604
    %vm1642 = vcmask 156672
    %v1643 = vsel %vm1642, %v1606, 0.0
    %1644 = vadd.xlane.f32.xlu0 %v1643
    %v1645 = vpop.xlane.xlu0 %1644
    %v1646 = vsel %vm1642, %v1607, 0.0
    %1647 = vadd.xlane.f32.xlu0 %v1646
    %v1648 = vpop.xlane.xlu0 %1647
    %v1649 = vsel %vm1642, %v1608, 0.0
    %1650 = vadd.xlane.f32.xlu0 %v1649
    %v1651 = vpop.xlane.xlu0 %1650
    %v1652 = vsel %vm1642, %v1609, 0.0
    %1653 = vadd.xlane.f32.xlu0 %v1652
    %v1654 = vpop.xlane.xlu0 %1653
    %v1655 = vsel %vm1642, %v1610, 0.0
    %1656 = vadd.xlane.f32.xlu0 %v1655
    %v1657 = vpop.xlane.xlu0 %1656
    %v1658 = vsel %vm1642, %v1611, 0.0
    %1659 = vadd.xlane.f32.xlu0 %v1658
    %v1660 = vpop.xlane.xlu0 %1659
    %v1661 = vsel %vm1642, %v1612, 0.0
    %1662 = vadd.xlane.f32.xlu0 %v1661
    %v1663 = vpop.xlane.xlu0 %1662
    %v1664 = vsel %vm1642, %v1613, 0.0
    %1665 = vadd.xlane.f32.xlu0 %v1664
    %v1666 = vpop.xlane.xlu0 %1665
    %v1667 = vsel %vm1642, %v1614, 0.0
    %1668 = vadd.xlane.f32.xlu0 %v1667
    %v1669 = vpop.xlane.xlu0 %1668
    %v1670 = vsel %vm1642, %v1615, 0.0
    %1671 = vadd.xlane.f32.xlu0 %v1670
    %v1672 = vpop.xlane.xlu0 %1671
    %v1673 = vsel %vm1642, %v1616, 0.0
    %1674 = vadd.xlane.f32.xlu0 %v1673
    %v1675 = vpop.xlane.xlu0 %1674
    %v1676 = vsel %vm1642, %v1617, 0.0
    %1677 = vadd.xlane.f32.xlu0 %v1676
    %v1678 = vpop.xlane.xlu0 %1677
    %v1679 = vsel %vm1642, %v1618, 0.0
    %1680 = vadd.xlane.f32.xlu0 %v1679
    %v1681 = vpop.xlane.xlu0 %1680
    %v1682 = vsel %vm1642, %v1619, 0.0
    %1683 = vadd.xlane.f32.xlu0 %v1682
    %v1684 = vpop.xlane.xlu0 %1683
    %v1685 = vsel %vm1642, %v1620, 0.0
    %1686 = vadd.xlane.f32.xlu0 %v1685
    %v1687 = vpop.xlane.xlu0 %1686
    %v1688 = vsel %vm1642, %v1621, 0.0
    %1689 = vadd.xlane.f32.xlu0 %v1688
    %v1690 = vpop.xlane.xlu0 %1689
    %v1691 = vsel %vm1642, %v1622, 0.0
    %1692 = vadd.xlane.f32.xlu0 %v1691
    %v1693 = vpop.xlane.xlu0 %1692
    %v1694 = vsel %vm1642, %v1623, 0.0
    %1695 = vadd.xlane.f32.xlu0 %v1694
    %v1696 = vpop.xlane.xlu0 %1695
    %v1697 = vsel %vm1642, %v1624, 0.0
    %1698 = vadd.xlane.f32.xlu0 %v1697
    %v1699 = vpop.xlane.xlu0 %1698
    %v1700 = vsel %vm1642, %v1625, 0.0
    %1701 = vadd.xlane.f32.xlu0 %v1700
    %v1702 = vpop.xlane.xlu0 %1701
    %v1703 = vsel %vm1642, %v1626, 0.0
    %1704 = vadd.xlane.f32.xlu0 %v1703
    %v1705 = vpop.xlane.xlu0 %1704
    %v1706 = vsel %vm1642, %v1627, 0.0
    %1707 = vadd.xlane.f32.xlu0 %v1706
    %v1708 = vpop.xlane.xlu0 %1707
    %v1709 = vsel %vm1642, %v1628, 0.0
    %1710 = vadd.xlane.f32.xlu0 %v1709
    %v1711 = vpop.xlane.xlu0 %1710
    %v1712 = vsel %vm1642, %v1629, 0.0
    %1713 = vadd.xlane.f32.xlu0 %v1712
    %v1714 = vpop.xlane.xlu0 %1713
    %v1715 = vsel %vm1642, %v1630, 0.0
    %1716 = vadd.xlane.f32.xlu0 %v1715
    %v1717 = vpop.xlane.xlu0 %1716
    %v1718 = vsel %vm1642, %v1631, 0.0
    %1719 = vadd.xlane.f32.xlu0 %v1718
    %v1720 = vpop.xlane.xlu0 %1719
    %v1721 = vsel %vm1642, %v1632, 0.0
    %1722 = vadd.xlane.f32.xlu0 %v1721
    %v1723 = vpop.xlane.xlu0 %1722
    %v1724 = vsel %vm1642, %v1633, 0.0
    %1725 = vadd.xlane.f32.xlu0 %v1724
    %v1726 = vpop.xlane.xlu0 %1725
    %v1727 = vsel %vm1642, %v1634, 0.0
    %1728 = vadd.xlane.f32.xlu0 %v1727
    %v1729 = vpop.xlane.xlu0 %1728
    %v1730 = vsel %vm1642, %v1635, 0.0
    %1731 = vadd.xlane.f32.xlu0 %v1730
    %v1732 = vpop.xlane.xlu0 %1731
    %v1733 = vsel %vm1642, %v1636, 0.0
    %1734 = vadd.xlane.f32.xlu0 %v1733
    %v1735 = vpop.xlane.xlu0 %1734
    %v1736 = vsel %vm1642, %v1637, 0.0
    %1737 = vadd.xlane.f32.xlu0 %v1736
    %v1738 = vpop.xlane.xlu0 %1737
    %v1739 = vsel %vm1642, %v1638, 0.0
    %1740 = vadd.xlane.f32.xlu0 %v1739
    %v1741 = vpop.xlane.xlu0 %1740
    %v1742 = vsel %vm1642, %v1639, 0.0
    %1743 = vadd.xlane.f32.xlu0 %v1742
    %v1744 = vpop.xlane.xlu0 %1743
    %v1745 = vsel %vm1642, %v1640, 0.0
    %1746 = vadd.xlane.f32.xlu0 %v1745
    %v1747 = vpop.xlane.xlu0 %1746
    %v1748 = vsel %vm1642, %v1641, 0.0
    %1749 = vadd.xlane.f32.xlu0 %v1748
    %v1750 = vpop.xlane.xlu0 %1749
    %v1751 = vld [vmem:[#allocation5] sm:$0x1]
    %v1753 = vlaneseq
    %v1754 = vshrl.u32 %v1753, 7
    %v1755 = vsub.s32 0, %v1754
    %v1756 = vrot.slane %v1751, %v1755
    %1757 = vset.pattern.permute.xlu0 0
    %1758 = vperm.xlu0 %1757, %v1756
    %v1759 = vpop.permute.xlu0 %1758
    %v1761 = vadd.f32 %v1645, %v1759
    %v1762 = vadd.f32 %v1648, %v1759
    %v1763 = vadd.f32 %v1651, %v1759
    %v1764 = vadd.f32 %v1654, %v1759
    %v1765 = vadd.f32 %v1657, %v1759
    %v1766 = vadd.f32 %v1660, %v1759
    %v1767 = vadd.f32 %v1663, %v1759
    %v1768 = vadd.f32 %v1666, %v1759
    %v1769 = vadd.f32 %v1669, %v1759
    %v1770 = vadd.f32 %v1672, %v1759
    %v1771 = vadd.f32 %v1675, %v1759
    %v1772 = vadd.f32 %v1678, %v1759
    %v1773 = vadd.f32 %v1681, %v1759
    %v1774 = vadd.f32 %v1684, %v1759
    %v1775 = vadd.f32 %v1687, %v1759
    %v1776 = vadd.f32 %v1690, %v1759
    %v1777 = vadd.f32 %v1693, %v1759
    %v1778 = vadd.f32 %v1696, %v1759
    %v1779 = vadd.f32 %v1699, %v1759
    %v1780 = vadd.f32 %v1702, %v1759
    %v1781 = vadd.f32 %v1705, %v1759
    %v1782 = vadd.f32 %v1708, %v1759
    %v1783 = vadd.f32 %v1711, %v1759
    %v1784 = vadd.f32 %v1714, %v1759
    %v1785 = vadd.f32 %v1717, %v1759
    %v1786 = vadd.f32 %v1720, %v1759
    %v1787 = vadd.f32 %v1723, %v1759
    %v1788 = vadd.f32 %v1726, %v1759
    %v1789 = vadd.f32 %v1729, %v1759
    %v1790 = vadd.f32 %v1732, %v1759
    %v1791 = vadd.f32 %v1735, %v1759
    %v1792 = vadd.f32 %v1738, %v1759
    %v1793 = vadd.f32 %v1741, %v1759
    %v1794 = vadd.f32 %v1744, %v1759
    %v1795 = vadd.f32 %v1747, %v1759
    %v1796 = vadd.f32 %v1750, %v1759
    %v1833 = vlaneseq
    %v1834 = vshrl.u32 %v1833, 7
    %v1835 = vsub.s32 %v464, %v1834
    %v1836 = vrot.slane %v1761, %v1835
    %v1837 = vlaneseq
    %v1838 = vshrl.u32 %v1837, 7
    %v1839 = vsub.s32 %v464, %v1838
    %v1840 = vrot.slane %v1762, %v1839
    %v1841 = vlaneseq
    %v1842 = vshrl.u32 %v1841, 7
    %v1843 = vsub.s32 %v464, %v1842
    %v1844 = vrot.slane %v1763, %v1843
    %v1845 = vlaneseq
    %v1846 = vshrl.u32 %v1845, 7
    %v1847 = vsub.s32 %v464, %v1846
    %v1848 = vrot.slane %v1764, %v1847
    %v1849 = vlaneseq
    %v1850 = vshrl.u32 %v1849, 7
    %v1851 = vsub.s32 %v464, %v1850
    %v1852 = vrot.slane %v1765, %v1851
    %v1853 = vlaneseq
    %v1854 = vshrl.u32 %v1853, 7
    %v1855 = vsub.s32 %v464, %v1854
    %v1856 = vrot.slane %v1766, %v1855
    %v1857 = vlaneseq
    %v1858 = vshrl.u32 %v1857, 7
    %v1859 = vsub.s32 %v464, %v1858
    %v1860 = vrot.slane %v1767, %v1859
    %v1861 = vlaneseq
    %v1862 = vshrl.u32 %v1861, 7
    %v1863 = vsub.s32 %v464, %v1862
    %v1864 = vrot.slane %v1768, %v1863
    %v1865 = vlaneseq
    %v1866 = vshrl.u32 %v1865, 7
    %v1867 = vsub.s32 %v464, %v1866
    %v1868 = vrot.slane %v1769, %v1867
    %v1869 = vlaneseq
    %v1870 = vshrl.u32 %v1869, 7
    %v1871 = vsub.s32 %v464, %v1870
    %v1872 = vrot.slane %v1770, %v1871
    %v1873 = vlaneseq
    %v1874 = vshrl.u32 %v1873, 7
    %v1875 = vsub.s32 %v464, %v1874
    %v1876 = vrot.slane %v1771, %v1875
    %v1877 = vlaneseq
    %v1878 = vshrl.u32 %v1877, 7
    %v1879 = vsub.s32 %v464, %v1878
    %v1880 = vrot.slane %v1772, %v1879
    %v1881 = vlaneseq
    %v1882 = vshrl.u32 %v1881, 7
    %v1883 = vsub.s32 %v464, %v1882
    %v1884 = vrot.slane %v1773, %v1883
    %v1885 = vlaneseq
    %v1886 = vshrl.u32 %v1885, 7
    %v1887 = vsub.s32 %v464, %v1886
    %v1888 = vrot.slane %v1774, %v1887
    %v1889 = vlaneseq
    %v1890 = vshrl.u32 %v1889, 7
    %v1891 = vsub.s32 %v464, %v1890
    %v1892 = vrot.slane %v1775, %v1891
    %v1893 = vlaneseq
    %v1894 = vshrl.u32 %v1893, 7
    %v1895 = vsub.s32 %v464, %v1894
    %v1896 = vrot.slane %v1776, %v1895
    %v1897 = vlaneseq
    %v1898 = vshrl.u32 %v1897, 7
    %v1899 = vsub.s32 %v464, %v1898
    %v1900 = vrot.slane %v1777, %v1899
    %v1901 = vlaneseq
    %v1902 = vshrl.u32 %v1901, 7
    %v1903 = vsub.s32 %v464, %v1902
    %v1904 = vrot.slane %v1778, %v1903
    %v1905 = vlaneseq
    %v1906 = vshrl.u32 %v1905, 7
    %v1907 = vsub.s32 %v464, %v1906
    %v1908 = vrot.slane %v1779, %v1907
    %v1909 = vlaneseq
    %v1910 = vshrl.u32 %v1909, 7
    %v1911 = vsub.s32 %v464, %v1910
    %v1912 = vrot.slane %v1780, %v1911
    %v1913 = vlaneseq
    %v1914 = vshrl.u32 %v1913, 7
    %v1915 = vsub.s32 %v464, %v1914
    %v1916 = vrot.slane %v1781, %v1915
    %v1917 = vlaneseq
    %v1918 = vshrl.u32 %v1917, 7
    %v1919 = vsub.s32 %v464, %v1918
    %v1920 = vrot.slane %v1782, %v1919
    %v1921 = vlaneseq
    %v1922 = vshrl.u32 %v1921, 7
    %v1923 = vsub.s32 %v464, %v1922
    %v1924 = vrot.slane %v1783, %v1923
    %v1925 = vlaneseq
    %v1926 = vshrl.u32 %v1925, 7
    %v1927 = vsub.s32 %v464, %v1926
    %v1928 = vrot.slane %v1784, %v1927
    %v1929 = vlaneseq
    %v1930 = vshrl.u32 %v1929, 7
    %v1931 = vsub.s32 %v464, %v1930
    %v1932 = vrot.slane %v1785, %v1931
    %v1933 = vlaneseq
    %v1934 = vshrl.u32 %v1933, 7
    %v1935 = vsub.s32 %v464, %v1934
    %v1936 = vrot.slane %v1786, %v1935
    %v1937 = vlaneseq
    %v1938 = vshrl.u32 %v1937, 7
    %v1939 = vsub.s32 %v464, %v1938
    %v1940 = vrot.slane %v1787, %v1939
    %v1941 = vlaneseq
    %v1942 = vshrl.u32 %v1941, 7
    %v1943 = vsub.s32 %v464, %v1942
    %v1944 = vrot.slane %v1788, %v1943
    %v1945 = vlaneseq
    %v1946 = vshrl.u32 %v1945, 7
    %v1947 = vsub.s32 %v464, %v1946
    %v1948 = vrot.slane %v1789, %v1947
    %v1949 = vlaneseq
    %v1950 = vshrl.u32 %v1949, 7
    %v1951 = vsub.s32 %v464, %v1950
    %v1952 = vrot.slane %v1790, %v1951
    %v1953 = vlaneseq
    %v1954 = vshrl.u32 %v1953, 7
    %v1955 = vsub.s32 %v464, %v1954
    %v1956 = vrot.slane %v1791, %v1955
    %v1957 = vlaneseq
    %v1958 = vshrl.u32 %v1957, 7
    %v1959 = vsub.s32 %v464, %v1958
    %v1960 = vrot.slane %v1792, %v1959
    %v1961 = vlaneseq
    %v1962 = vshrl.u32 %v1961, 7
    %v1963 = vsub.s32 %v464, %v1962
    %v1964 = vrot.slane %v1793, %v1963
    %v1965 = vlaneseq
    %v1966 = vshrl.u32 %v1965, 7
    %v1967 = vsub.s32 %v464, %v1966
    %v1968 = vrot.slane %v1794, %v1967
    %v1969 = vlaneseq
    %v1970 = vshrl.u32 %v1969, 7
    %v1971 = vsub.s32 %v464, %v1970
    %v1972 = vrot.slane %v1795, %v1971
    %v1973 = vlaneseq
    %v1974 = vshrl.u32 %v1973, 7
    %v1975 = vsub.s32 %v464, %v1974
    %v1976 = vrot.slane %v1796, %v1975
    %vm1977 = vcmask 1041409
    %v1978 = vsel %vm1977, %v1840, %v1836
    %vm1979 = vcmask 1042434
    %v1980 = vsel %vm1979, %v1844, %v1978
    %vm1981 = vcmask 1043459
    %v1982 = vsel %vm1981, %v1848, %v1980
    %vm1983 = vcmask 1044484
    %v1984 = vsel %vm1983, %v1852, %v1982
    %vm1985 = vcmask 1045509
    %v1986 = vsel %vm1985, %v1856, %v1984
    %vm1987 = vcmask 1046534
    %v1988 = vsel %vm1987, %v1860, %v1986
    %vm1989 = vcmask 1047559
    %v1990 = vsel %vm1989, %v1864, %v1988
    %v1991 = vsel %vm1977, %v1872, %v1868
    %v1992 = vsel %vm1979, %v1876, %v1991
    %v1993 = vsel %vm1981, %v1880, %v1992
    %v1994 = vsel %vm1983, %v1884, %v1993
    %v1995 = vsel %vm1985, %v1888, %v1994
    %v1996 = vsel %vm1987, %v1892, %v1995
    %v1997 = vsel %vm1989, %v1896, %v1996
    %v1998 = vsel %vm1977, %v1904, %v1900
    %v1999 = vsel %vm1979, %v1908, %v1998
    %v2000 = vsel %vm1981, %v1912, %v1999
    %v2001 = vsel %vm1983, %v1916, %v2000
    %v2002 = vsel %vm1985, %v1920, %v2001
    %v2003 = vsel %vm1987, %v1924, %v2002
    %v2004 = vsel %vm1989, %v1928, %v2003
    %v2005 = vsel %vm1977, %v1936, %v1932
    %v2006 = vsel %vm1979, %v1940, %v2005
    %v2007 = vsel %vm1981, %v1944, %v2006
    %v2008 = vsel %vm1983, %v1948, %v2007
    %v2009 = vsel %vm1985, %v1952, %v2008
    %v2010 = vsel %vm1987, %v1956, %v2009
    %v2011 = vsel %vm1989, %v1960, %v2010
    %v2012 = vsel %vm1977, %v1968, %v1964
    %v2013 = vsel %vm1979, %v1972, %v2012
    %v2014 = vsel %vm1981, %v1976, %v2013
    %2020 = vxpose.xlu0.b32.start [1/16] %v1990, 128
    %2021 = vxpose.xlu0.b32.cont [2/16] %v1997, 128
    %2022 = vxpose.xlu0.b32.cont [3/16] %v2004, 128
    %2023 = vxpose.xlu0.b32.cont [4/16] %v2011, 128
    %2024 = vxpose.xlu0.b32.cont [5/16] %v2014, 128
    %2025 = vxpose.xlu0.b32.cont [6/16] 0.0, 128
    %2026 = vxpose.xlu0.b32.cont [7/16] 0.0, 128
    %2027 = vxpose.xlu0.b32.cont [8/16] 0.0, 128
    %2028 = vxpose.xlu0.b32.cont [9/16] 0.0, 128
    %2029 = vxpose.xlu0.b32.cont [10/16] 0.0, 128
    %2030 = vxpose.xlu0.b32.cont [11/16] 0.0, 128
    %2031 = vxpose.xlu0.b32.cont [12/16] 0.0, 128
    %2032 = vxpose.xlu0.b32.cont [13/16] 0.0, 128
    %2033 = vxpose.xlu0.b32.cont [14/16] 0.0, 128
    %2034 = vxpose.xlu0.b32.cont [15/16] 0.0, 128
    %2035 = vxpose.xlu0.b32.end [16/16] 0.0, 128
    %v2036 = vpop.trf.xlu0
    %v2037 = vpop.trf.xlu0
    %v2038 = vpop.trf.xlu0
    %v2039 = vpop.trf.xlu0
    %v2040 = vpop.trf.xlu0
    %v2041 = vpop.trf.xlu0
    %v2042 = vpop.trf.xlu0
    %v2043 = vpop.trf.xlu0
    %v2044 = vpop.trf.xlu0
    %v2045 = vpop.trf.xlu0
    %v2046 = vpop.trf.xlu0
    %v2047 = vpop.trf.xlu0
    %v2048 = vpop.trf.xlu0
    %v2049 = vpop.trf.xlu0
    %v2050 = vpop.trf.xlu0
    %v2051 = vpop.trf.xlu0
    %v2052 = vmul.f32 %v1242, %v2036
    %vm2053 = vcmask 287744
    %2054 = vst.msk [vmem:[#allocation12] sm:$0x3] %vm2053, %v2052
    // Predicated region
    $region77: #{seriesnet_forward.1} parent=1 // pred_check
      _
    $region78: #{seriesnet_forward.1} parent=1 // pred_check_branch
      %2056 = sbr.rel (0) target = $region80
    $region79: #{seriesnet_forward.1} parent=1 // pred_region
      %s2058 = ssub.s32 32, 32
      %2059 = vsyncadd [#allocation8], %s2058
      %s2061 = sshll.u32 [#allocation12], 4
      %s2062 = int_to_ptr.vmem [resolvable:$true] %s2061
      %2064 = dma.vmem_to_hbm [thread:$0]  %s2062, 32, %s14, [#allocation8]
    $region80: #{seriesnet_forward.1} parent=1 // pred_fallthru
      _
    // Predicated region
    $region81: #{seriesnet_forward.1} parent=1 // pred_check
      _
    $region82: #{seriesnet_forward.1} parent=1 // pred_check_branch
      %2066 = sbr.rel (0) target = $region84
    $region83: #{seriesnet_forward.1} parent=1 // pred_region
      %2067 = dma.done [#allocation8], 32
    $region84: #{seriesnet_forward.1} parent=1 // pred_fallthru
      _
    %2068 = vsyncpa [#allocation7], 1
    %2069 = vsyncpa [#allocation10], 1
    %2070 = vsyncpa [#allocation8], 1

</llo_original>
